<compile_context>
chip_gen: v5e
topology: v5e:2x2
jax: 0.10.0
libtpu: 0.0.40
codegen_flags: <defaults>
</compile_context>

<pallas_src>
import functools
import math

import jax
import jax.numpy as jnp
import numpy as np
from jax.experimental import pallas as pl
from jax.experimental.pallas import tpu as pltpu


# ---------------------------------------------------------------------------
# Kernel 1: fused QKV projection.
# ---------------------------------------------------------------------------
def _qkv_proj_kernel(x_ref, w_ref, b_ref, q_ref, k_ref, v_ref,
                     *, n_heads, head_dim, d_model, inv_scale):
    # x_ref: (1, tp, C) f32      w_ref: (C, 3C) bf16     b_ref: (1, 3C) f32
    # q_ref: (1, H, tp, D) bf16  k_ref: (1, H, D, tp) bf16  v_ref: (1, H, tp, D)
    D, C = head_dim, d_model
    x = x_ref[0].astype(jnp.bfloat16)                                 # (tp, C)
    qkv = jnp.dot(x, w_ref[...], preferred_element_type=jnp.float32)
    qkv = qkv + b_ref[...]                                            # (tp, 3C)

    # Slices below are at C-aligned lane offsets (cheap for C % 128 == 0).
    q_full = (qkv[:, 0 * C:1 * C] * inv_scale).astype(jnp.bfloat16)   # scale folded
    k_full = qkv[:, 1 * C:2 * C]
    v_full = qkv[:, 2 * C:3 * C].astype(jnp.bfloat16)

    # K^T: one transpose per pass-1 tile instead of one per (qi, ki) step.
    k_t = jnp.transpose(k_full).astype(jnp.bfloat16)                  # (C, tp)
    k_ref[0] = k_t.reshape(n_heads, D, k_t.shape[-1])                 # (H, D, tp)

    # Per-head lane slices done once here, never in the attention kernel.
    for h in range(n_heads):                                          # static unroll
        q_ref[0, h] = q_full[:, h * D:(h + 1) * D]
        v_ref[0, h] = v_full[:, h * D:(h + 1) * D]


# ---------------------------------------------------------------------------
# Kernel 2: flash attention (online softmax) + fused head-merge/out-projection.
# ---------------------------------------------------------------------------
def _flash_attn_kernel(q_ref, kt_ref, v_ref, wo_ref, bo_ref, o_ref,
                       m_sc, l_sc, acc_sc, *, n_heads, block_q, block_kv):
    # q_ref: (1, H, tq, D) bf16 (pre-scaled)   kt_ref: (1, H, D, tk) bf16
    # v_ref: (1, H, tk, D) bf16   wo_ref: (H, D, C) bf16   bo_ref: (1, C) f32
    # o_ref: (1, tq, C)   scratch: m/l (H, tq, 1) f32, acc (H, tq, D) f32
    qi = pl.program_id(1)
    ki = pl.program_id(2)
    nk = pl.num_programs(2)

    @pl.when(ki == 0)
    def _init():
        m_sc[...] = jnp.full(m_sc.shape, -jnp.inf, jnp.float32)
        l_sc[...] = jnp.zeros(l_sc.shape, jnp.float32)
        acc_sc[...] = jnp.zeros(acc_sc.shape, jnp.float32)

    q_start = qi * block_q
    k_start = ki * block_kv
    # Tile participates iff it is not entirely in the causal future of q tile.
    is_live = k_start <= q_start + (block_q - 1)
    # In-tile causal mask only needed if the tile straddles the diagonal.
    on_diag = (k_start + block_kv - 1) > q_start

    def _update(apply_mask):
        q = q_ref[0]                # (H, tq, D) bf16, already scaled by 1/sqrt(D)
        kt = kt_ref[0]              # (H, D, tk) bf16
        v = v_ref[0]                # (H, tk, D) bf16
        s = jnp.einsum('hqd,hdk->hqk', q, kt,
                       preferred_element_type=jnp.float32)    # (H, tq, tk) f32
        if apply_mask:
            q_pos = q_start + jax.lax.broadcasted_iota(
                jnp.int32, (block_q, block_kv), 0)
            k_pos = k_start + jax.lax.broadcasted_iota(
                jnp.int32, (block_q, block_kv), 1)
            s = jnp.where((k_pos <= q_pos)[None, :, :], s, -jnp.inf)

        m_prev = m_sc[...]                                    # (H, tq, 1)
        m_new = jnp.maximum(m_prev, jnp.max(s, axis=-1, keepdims=True))
        alpha = jnp.exp(m_prev - m_new)
        p = jnp.exp(s - m_new)                                # (H, tq, tk)
        l_sc[...] = alpha * l_sc[...] + jnp.sum(p, axis=-1, keepdims=True)
        acc_sc[...] = alpha * acc_sc[...] + jnp.einsum(
            'hqk,hkd->hqd', p.astype(jnp.bfloat16), v,
            preferred_element_type=jnp.float32)
        m_sc[...] = m_new

    @pl.when(jnp.logical_and(is_live, on_diag))
    def _masked():
        _update(apply_mask=True)

    @pl.when(jnp.logical_and(is_live, jnp.logical_not(on_diag)))
    def _unmasked():
        _update(apply_mask=False)

    @pl.when(ki == nk - 1)
    def _finalize():
        # Normalize (EUP reciprocal), then fuse head-merge + out-projection:
        # y[q, c] = sum_{h,d} acc[h, q, d] * w_out[h*D + d, c] + b_out[c]
        acc = acc_sc[...] * pl.reciprocal(l_sc[...], approx=True)    # (H, tq, D)
        w_o = wo_ref[...]                                            # (H, D, C)
        y = jnp.dot(acc[0].astype(jnp.bfloat16), w_o[0],
                    preferred_element_type=jnp.float32)
        for h in range(1, n_heads):                                  # static unroll
            y = y + jnp.dot(acc[h].astype(jnp.bfloat16), w_o[h],
                            preferred_element_type=jnp.float32)
        o_ref[0] = (y + bo_ref[...]).astype(o_ref.dtype)


# ---------------------------------------------------------------------------
# VMEM budgeting (per-generation: ~75% of physical VMEM, >= 32 MiB).
# ---------------------------------------------------------------------------
def _vmem_limit_bytes(H, D, C, bq, bk):
    f32, bf16, lane = 4, 2, 128
    Dp = max(D, lane)                                   # minor-dim lane padding
    est = (2 * H * bq * bk * f32                        # s + p score tiles
           + H * bq * (2 * lane + Dp) * f32             # m, l, acc scratch
           + 2 * H * bq * Dp * bf16                     # Q block (double buffered)
           + 2 * H * D * bk * bf16                      # K^T block
           + 2 * H * bk * Dp * bf16                     # V block
           + 2 * bq * C * f32                           # output block
           + H * D * C * bf16 + C * f32)                # resident weights
    try:
        cap = pltpu.get_tpu_info().vmem_capacity_bytes  # 64 MiB v7x, 128 MiB v5e/v6e
    except Exception:
        cap = 128 * 1024 * 1024
    return int(min(max(int(1.5 * est), 32 * 1024 * 1024), cap * 3 // 4))


# ---------------------------------------------------------------------------
# Wrapper
# ---------------------------------------------------------------------------
def neuroplastic_sparse_attention(x, w_qkv, b_qkv, w_out, b_out, n_heads,
                                  *, block_q=256, block_kv=512, block_proj=256):
    """Eval-mode forward.

    x: (B, T, C) f32.  w_qkv: (C, 3C) [in, out], b_qkv: (3C,),
    w_out: (C, C) [in, out], b_out: (C,).
    """
    B, T, C = x.shape
    H = n_heads
    D = C // H
    inv_scale = 1.0 / math.sqrt(D)

    block_q = min(block_q, T)
    block_kv = min(block_kv, T)
    block_proj = min(block_proj, T)
    assert T % block_q == 0 and T % block_kv == 0 and T % block_proj == 0, \
        "T must be a multiple of the tile sizes"

    # Host-side (free) weight re-layout.
    w_qkv_bf = w_qkv.astype(jnp.bfloat16)               # (C, 3C) native layout
    b_qkv_2d = b_qkv.reshape(1, 3 * C)
    w_o = w_out.reshape(H, D, C).astype(jnp.bfloat16)   # per-head slabs for epilogue
    b_o = b_out.reshape(1, C)

    vmem_limit = _vmem_limit_bytes(H, D, C, block_q, block_kv)
    n_q = T // block_q
    n_kv = T // block_kv

    # ---- Pass 1: fused QKV projection --------------------------------------
    q_spec = pl.BlockSpec((1, H, block_proj, D), lambda b, t: (b, 0, t, 0))
    k_spec = pl.BlockSpec((1, H, D, block_proj), lambda b, t: (b, 0, 0, t))

    q, k_t, v = pl.pallas_call(
        functools.partial(_qkv_proj_kernel, n_heads=H, head_dim=D, d_model=C,
                          inv_scale=inv_scale),
        out_shape=[jax.ShapeDtypeStruct((B, H, T, D), jnp.bfloat16),
                   jax.ShapeDtypeStruct((B, H, D, T), jnp.bfloat16),
                   jax.ShapeDtypeStruct((B, H, T, D), jnp.bfloat16)],
        grid_spec=pltpu.PrefetchScalarGridSpec(
            num_scalar_prefetch=0,
            grid=(B, T // block_proj),
            in_specs=[
                pl.BlockSpec((1, block_proj, C), lambda b, t: (b, t, 0)),
                pl.BlockSpec((C, 3 * C), lambda b, t: (0, 0)),   # resident weights
                pl.BlockSpec((1, 3 * C), lambda b, t: (0, 0)),
            ],
            out_specs=[q_spec, k_spec, q_spec],
        ),
        compiler_params=pltpu.CompilerParams(
            dimension_semantics=("parallel", "parallel"),
            vmem_limit_bytes=vmem_limit),
        cost_estimate=pl.CostEstimate(
            flops=2 * B * T * C * 3 * C,
            transcendentals=0,
            bytes_accessed=B * T * C * 4 + C * 3 * C * 2 + 3 * B * H * T * D * 2),
    )(x, w_qkv_bf, b_qkv_2d)

    # ---- Pass 2: flash attention + fused output projection -----------------
    def _kv_block(qi, ki):
        # Clamp to the last causally-needed kv tile for this q tile: skipped
        # (fully-future) steps map to the already-resident block so Pallas
        # elides their K/V DMA.  The pl.when compute gate (on the real ki)
        # guarantees the duplicated block never touches the accumulator.
        last = (qi * block_q + block_q - 1) // block_kv
        return jnp.minimum(ki, last)

    out = pl.pallas_call(
        functools.partial(_flash_attn_kernel, n_heads=H,
                          block_q=block_q, block_kv=block_kv),
        out_shape=jax.ShapeDtypeStruct((B, T, C), x.dtype),
        grid_spec=pltpu.PrefetchScalarGridSpec(
            num_scalar_prefetch=0,
            grid=(B, n_q, n_kv),
            in_specs=[
                pl.BlockSpec((1, H, block_q, D),
                             lambda b, qi, ki: (b, 0, qi, 0)),
                pl.BlockSpec((1, H, D, block_kv),
                             lambda b, qi, ki: (b, 0, 0, _kv_block(qi, ki))),
                pl.BlockSpec((1, H, block_kv, D),
                             lambda b, qi, ki: (b, 0, _kv_block(qi, ki), 0)),
                pl.BlockSpec((H, D, C), lambda b, qi, ki: (0, 0, 0)),   # resident
                pl.BlockSpec((1, C), lambda b, qi, ki: (0, 0)),         # resident
            ],
            out_specs=pl.BlockSpec((1, block_q, C), lambda b, qi, ki: (b, qi, 0)),
            scratch_shapes=[
                pltpu.VMEM((H, block_q, 1), jnp.float32),   # m (running max)
                pltpu.VMEM((H, block_q, 1), jnp.float32),   # l (running denom)
                pltpu.VMEM((H, block_q, D), jnp.float32),   # acc
            ],
        ),
        compiler_params=pltpu.CompilerParams(
            dimension_semantics=("parallel", "parallel", "arbitrary"),
            vmem_limit_bytes=vmem_limit),
        cost_estimate=pl.CostEstimate(
            flops=2 * B * H * T * T * D + 2 * B * T * C * C,       # ~causal-halved
            transcendentals=B * H * T * T // 2,
            bytes_accessed=(B * H * T * D * 2                       # Q
                            + 2 * B * H * T * D * 2 * (n_q + 1) // 2  # K,V re-reads
                            + H * D * C * 2 + B * T * C * 4)),       # weights + out
    )(q, k_t, v, w_o, b_o)

    return out


# ---------------------------------------------------------------------------
# Pure-JAX f32 reference (mirrors the PyTorch eval forward)
# ---------------------------------------------------------------------------
def _reference(x, w_qkv, b_qkv, w_out, b_out, n_heads):
    B, T, C = x.shape
    D = C // n_heads
    scale = math.sqrt(D)
    qkv = x @ w_qkv + b_qkv                                # (B, T, 3C)
    qkv = qkv.reshape(B, T, 3, n_heads, D).transpose(2, 0, 3, 1, 4)
    q, k, v = qkv[0], qkv[1], qkv[2]                       # (B, H, T, D)
    attn = jnp.einsum('bhtd,bhsd->bhts', q, k) / scale
    mask = jnp.triu(jnp.ones((T, T), dtype=bool), k=1)
    attn = jnp.where(mask, -jnp.inf, attn)
    attn = jax.nn.softmax(attn, axis=-1)
    out = jnp.einsum('bhts,bhsd->bhtd', attn, v)
    out = out.transpose(0, 2, 1, 3).reshape(B, T, C)
    return out @ w_out + b_out


if __name__ == "__main__":
    # Module config: d_model=128, n_heads=4 (head_dim=32).
    d_model, n_heads = 128, 4

    key = jax.random.PRNGKey(0)
    kx1, kx2, k1, k2, k3, k4 = jax.random.split(key, 6)

    lim = 1.0 / math.sqrt(d_model)
    w_qkv = jax.random.uniform(k1, (d_model, 3 * d_model),
                               minval=-lim, maxval=lim, dtype=jnp.float32)
    b_qkv = jax.random.uniform(k2, (3 * d_model,),
                               minval=-lim, maxval=lim, dtype=jnp.float32)
    w_out = jax.random.uniform(k3, (d_model, d_model),
                               minval=-lim, maxval=lim, dtype=jnp.float32)
    b_out = jax.random.uniform(k4, (d_model,),
                               minval=-lim, maxval=lim, dtype=jnp.float32)

    # Test 1: 2x2 q/kv tile grid (T=256, 128x128 tiles) — exercises online
    # softmax accumulation, diagonal masked tiles, the unmasked below-diagonal
    # path, and the DMA-eliding clamp on the fully-skipped causal tile.
    B, T = 2, 256
    x = jax.random.normal(kx1, (B, T, d_model), dtype=jnp.float32)
    y = neuroplastic_sparse_attention(x, w_qkv, b_qkv, w_out, b_out, n_heads,
                                      block_q=128, block_kv=128, block_proj=128)
    y = jax.block_until_ready(y)
    y_ref = _reference(x, w_qkv, b_qkv, w_out, b_out, n_heads)
    np.testing.assert_allclose(np.asarray(y), np.asarray(y_ref),
                               rtol=5e-2, atol=5e-2)

    # Test 2: default (large, clamped-to-T) tiles — single-tile path.
    B2, T2 = 2, 128
    x2 = jax.random.normal(kx2, (B2, T2, d_model), dtype=jnp.float32)
    y2 = neuroplastic_sparse_attention(x2, w_qkv, b_qkv, w_out, b_out, n_heads)
    y2 = jax.block_until_ready(y2)
    y2_ref = _reference(x2, w_qkv, b_qkv, w_out, b_out, n_heads)
    np.testing.assert_allclose(np.asarray(y2), np.asarray(y2_ref),
                               rtol=5e-2, atol=5e-2)

    print("KERNEL_OK")
</pallas_src>

<mosaic_0001>
module attributes {stable_mosaic.version = 11 : i64} {
  func.func @_qkv_proj_kernel(%arg0: i32, %arg1: i32, %arg2: memref<1x128x128xf32, #tpu.memory_space<vmem>>, %arg3: memref<128x384xbf16, #tpu.memory_space<vmem>>, %arg4: memref<1x384xf32, #tpu.memory_space<vmem>>, %arg5: memref<1x4x128x32xbf16, #tpu.memory_space<vmem>>, %arg6: memref<1x4x32x128xbf16, #tpu.memory_space<vmem>>, %arg7: memref<1x4x128x32xbf16, #tpu.memory_space<vmem>>) attributes {dimension_semantics = [#tpu.dimension_semantics<parallel>, #tpu.dimension_semantics<parallel>], iteration_bounds = array<i64: 2, 2>, scalar_prefetch = 0 : i64, scratch_operands = 0 : i64, tpu.core_type = #tpu.core_type<tc>, window_params = [{transform_indices = @transform_0, window_bounds = array<i64: 1, 128, 128>}, {pipeline_mode = #tpu.pipeline_mode<synchronous>, transform_indices = @transform_1, window_bounds = array<i64: 128, 384>}, {pipeline_mode = #tpu.pipeline_mode<synchronous>, transform_indices = @transform_2, window_bounds = array<i64: 1, 384>}, {transform_indices = @transform_3, window_bounds = array<i64: 1, 4, 128, 32>}, {transform_indices = @transform_4, window_bounds = array<i64: 1, 4, 32, 128>}, {transform_indices = @transform_5, window_bounds = array<i64: 1, 4, 128, 32>}]} {
    %c0 = arith.constant 0 : index
    %c0_0 = arith.constant 0 : index
    %c0_1 = arith.constant 0 : index
    %0 = vector.load %arg2[%c0, %c0_0, %c0_1] : memref<1x128x128xf32, #tpu.memory_space<vmem>>, vector<1x128x128xf32>
    %1 = vector.shape_cast %0 : vector<1x128x128xf32> to vector<128x128xf32>
    %2 = arith.truncf %1 : vector<128x128xf32> to vector<128x128xbf16>
    %c0_2 = arith.constant 0 : index
    %c0_3 = arith.constant 0 : index
    %3 = vector.load %arg3[%c0_2, %c0_3] : memref<128x384xbf16, #tpu.memory_space<vmem>>, vector<128x384xbf16>
    %cst = arith.constant dense<0.000000e+00> : vector<128x384xf32>
    %4 = tpu.matmul %2, %3, %cst {dimension_numbers = #tpu.dot_dimension_numbers<[1], [0], [0], [1], [0, 0, 1, 1], [], []>} : vector<128x128xbf16>, vector<128x384xbf16>, vector<128x384xf32> -> vector<128x384xf32>
    %c0_4 = arith.constant 0 : index
    %c0_5 = arith.constant 0 : index
    %5 = vector.load %arg4[%c0_4, %c0_5] : memref<1x384xf32, #tpu.memory_space<vmem>>, vector<1x384xf32>
    %6 = vector.broadcast %5 : vector<1x384xf32> to vector<128x384xf32>
    %7 = arith.addf %4, %6 : vector<128x384xf32>
    %8 = vector.extract_strided_slice %7 {offsets = [0, 0], sizes = [128, 128], strides = [1, 1]} : vector<128x384xf32> to vector<128x128xf32>
    %cst_6 = arith.constant 0.176776692 : f32
    %9 = vector.broadcast %cst_6 : f32 to vector<128x128xf32>
    %10 = arith.mulf %8, %9 : vector<128x128xf32>
    %11 = arith.truncf %10 : vector<128x128xf32> to vector<128x128xbf16>
    %12 = vector.extract_strided_slice %7 {offsets = [0, 128], sizes = [128, 128], strides = [1, 1]} : vector<128x384xf32> to vector<128x128xf32>
    %13 = vector.extract_strided_slice %7 {offsets = [0, 256], sizes = [128, 128], strides = [1, 1]} : vector<128x384xf32> to vector<128x128xf32>
    %14 = arith.truncf %13 : vector<128x128xf32> to vector<128x128xbf16>
    %15 = tpu.transpose %12, [1, 0] : vector<128x128xf32> -> vector<128x128xf32>
    %16 = arith.truncf %15 : vector<128x128xf32> to vector<128x128xbf16>
    %17 = vector.shape_cast %16 : vector<128x128xbf16> to vector<4x32x128xbf16>
    %c0_7 = arith.constant 0 : index
    %c0_8 = arith.constant 0 : index
    %c0_9 = arith.constant 0 : index
    %c0_10 = arith.constant 0 : index
    %18 = vector.load %arg6[%c0_7, %c0_8, %c0_9, %c0_10] : memref<1x4x32x128xbf16, #tpu.memory_space<vmem>>, vector<1x4x32x128xbf16>
    %19 = vector.shape_cast %18 : vector<1x4x32x128xbf16> to vector<4x32x128xbf16>
    %20 = vector.shape_cast %17 : vector<4x32x128xbf16> to vector<1x4x32x128xbf16>
    tpu.vector_store %arg6[%c0_7, %c0_8, %c0_9, %c0_10], %20 {strides = array<i32>} : memref<1x4x32x128xbf16, #tpu.memory_space<vmem>>, vector<1x4x32x128xbf16>,
    %21 = vector.extract_strided_slice %11 {offsets = [0, 0], sizes = [128, 32], strides = [1, 1]} : vector<128x128xbf16> to vector<128x32xbf16>
    %c0_11 = arith.constant 0 : index
    %c0_12 = arith.constant 0 : index
    %c0_13 = arith.constant 0 : index
    %c0_14 = arith.constant 0 : index
    %22 = vector.load %arg5[%c0_11, %c0_12, %c0_13, %c0_14] : memref<1x4x128x32xbf16, #tpu.memory_space<vmem>>, vector<1x1x128x32xbf16>
    %23 = vector.shape_cast %22 : vector<1x1x128x32xbf16> to vector<128x32xbf16>
    %24 = vector.shape_cast %21 : vector<128x32xbf16> to vector<1x1x128x32xbf16>
    tpu.vector_store %arg5[%c0_11, %c0_12, %c0_13, %c0_14], %24 {strides = array<i32>} : memref<1x4x128x32xbf16, #tpu.memory_space<vmem>>, vector<1x1x128x32xbf16>,
    %25 = vector.extract_strided_slice %14 {offsets = [0, 0], sizes = [128, 32], strides = [1, 1]} : vector<128x128xbf16> to vector<128x32xbf16>
    %c0_15 = arith.constant 0 : index
    %c0_16 = arith.constant 0 : index
    %c0_17 = arith.constant 0 : index
    %c0_18 = arith.constant 0 : index
    %26 = vector.load %arg7[%c0_15, %c0_16, %c0_17, %c0_18] : memref<1x4x128x32xbf16, #tpu.memory_space<vmem>>, vector<1x1x128x32xbf16>
    %27 = vector.shape_cast %26 : vector<1x1x128x32xbf16> to vector<128x32xbf16>
    %28 = vector.shape_cast %25 : vector<128x32xbf16> to vector<1x1x128x32xbf16>
    tpu.vector_store %arg7[%c0_15, %c0_16, %c0_17, %c0_18], %28 {strides = array<i32>} : memref<1x4x128x32xbf16, #tpu.memory_space<vmem>>, vector<1x1x128x32xbf16>,
    %29 = vector.extract_strided_slice %11 {offsets = [0, 32], sizes = [128, 32], strides = [1, 1]} : vector<128x128xbf16> to vector<128x32xbf16>
    %c0_19 = arith.constant 0 : index
    %c1 = arith.constant 1 : index
    %c0_20 = arith.constant 0 : index
    %c0_21 = arith.constant 0 : index
    %30 = vector.load %arg5[%c0_19, %c1, %c0_20, %c0_21] : memref<1x4x128x32xbf16, #tpu.memory_space<vmem>>, vector<1x1x128x32xbf16>
    %31 = vector.shape_cast %30 : vector<1x1x128x32xbf16> to vector<128x32xbf16>
    %32 = vector.shape_cast %29 : vector<128x32xbf16> to vector<1x1x128x32xbf16>
    tpu.vector_store %arg5[%c0_19, %c1, %c0_20, %c0_21], %32 {strides = array<i32>} : memref<1x4x128x32xbf16, #tpu.memory_space<vmem>>, vector<1x1x128x32xbf16>,
    %33 = vector.extract_strided_slice %14 {offsets = [0, 32], sizes = [128, 32], strides = [1, 1]} : vector<128x128xbf16> to vector<128x32xbf16>
    %c0_22 = arith.constant 0 : index
    %c1_23 = arith.constant 1 : index
    %c0_24 = arith.constant 0 : index
    %c0_25 = arith.constant 0 : index
    %34 = vector.load %arg7[%c0_22, %c1_23, %c0_24, %c0_25] : memref<1x4x128x32xbf16, #tpu.memory_space<vmem>>, vector<1x1x128x32xbf16>
    %35 = vector.shape_cast %34 : vector<1x1x128x32xbf16> to vector<128x32xbf16>
    %36 = vector.shape_cast %33 : vector<128x32xbf16> to vector<1x1x128x32xbf16>
    tpu.vector_store %arg7[%c0_22, %c1_23, %c0_24, %c0_25], %36 {strides = array<i32>} : memref<1x4x128x32xbf16, #tpu.memory_space<vmem>>, vector<1x1x128x32xbf16>,
    %37 = vector.extract_strided_slice %11 {offsets = [0, 64], sizes = [128, 32], strides = [1, 1]} : vector<128x128xbf16> to vector<128x32xbf16>
    %c0_26 = arith.constant 0 : index
    %c2 = arith.constant 2 : index
    %c0_27 = arith.constant 0 : index
    %c0_28 = arith.constant 0 : index
    %38 = vector.load %arg5[%c0_26, %c2, %c0_27, %c0_28] : memref<1x4x128x32xbf16, #tpu.memory_space<vmem>>, vector<1x1x128x32xbf16>
    %39 = vector.shape_cast %38 : vector<1x1x128x32xbf16> to vector<128x32xbf16>
    %40 = vector.shape_cast %37 : vector<128x32xbf16> to vector<1x1x128x32xbf16>
    tpu.vector_store %arg5[%c0_26, %c2, %c0_27, %c0_28], %40 {strides = array<i32>} : memref<1x4x128x32xbf16, #tpu.memory_space<vmem>>, vector<1x1x128x32xbf16>,
    %41 = vector.extract_strided_slice %14 {offsets = [0, 64], sizes = [128, 32], strides = [1, 1]} : vector<128x128xbf16> to vector<128x32xbf16>
    %c0_29 = arith.constant 0 : index
    %c2_30 = arith.constant 2 : index
    %c0_31 = arith.constant 0 : index
    %c0_32 = arith.constant 0 : index
    %42 = vector.load %arg7[%c0_29, %c2_30, %c0_31, %c0_32] : memref<1x4x128x32xbf16, #tpu.memory_space<vmem>>, vector<1x1x128x32xbf16>
    %43 = vector.shape_cast %42 : vector<1x1x128x32xbf16> to vector<128x32xbf16>
    %44 = vector.shape_cast %41 : vector<128x32xbf16> to vector<1x1x128x32xbf16>
    tpu.vector_store %arg7[%c0_29, %c2_30, %c0_31, %c0_32], %44 {strides = array<i32>} : memref<1x4x128x32xbf16, #tpu.memory_space<vmem>>, vector<1x1x128x32xbf16>,
    %45 = vector.extract_strided_slice %11 {offsets = [0, 96], sizes = [128, 32], strides = [1, 1]} : vector<128x128xbf16> to vector<128x32xbf16>
    %c0_33 = arith.constant 0 : index
    %c3 = arith.constant 3 : index
    %c0_34 = arith.constant 0 : index
    %c0_35 = arith.constant 0 : index
    %46 = vector.load %arg5[%c0_33, %c3, %c0_34, %c0_35] : memref<1x4x128x32xbf16, #tpu.memory_space<vmem>>, vector<1x1x128x32xbf16>
    %47 = vector.shape_cast %46 : vector<1x1x128x32xbf16> to vector<128x32xbf16>
    %48 = vector.shape_cast %45 : vector<128x32xbf16> to vector<1x1x128x32xbf16>
    tpu.vector_store %arg5[%c0_33, %c3, %c0_34, %c0_35], %48 {strides = array<i32>} : memref<1x4x128x32xbf16, #tpu.memory_space<vmem>>, vector<1x1x128x32xbf16>,
    %49 = vector.extract_strided_slice %14 {offsets = [0, 96], sizes = [128, 32], strides = [1, 1]} : vector<128x128xbf16> to vector<128x32xbf16>
    %c0_36 = arith.constant 0 : index
    %c3_37 = arith.constant 3 : index
    %c0_38 = arith.constant 0 : index
    %c0_39 = arith.constant 0 : index
    %50 = vector.load %arg7[%c0_36, %c3_37, %c0_38, %c0_39] : memref<1x4x128x32xbf16, #tpu.memory_space<vmem>>, vector<1x1x128x32xbf16>
    %51 = vector.shape_cast %50 : vector<1x1x128x32xbf16> to vector<128x32xbf16>
    %52 = vector.shape_cast %49 : vector<128x32xbf16> to vector<1x1x128x32xbf16>
    tpu.vector_store %arg7[%c0_36, %c3_37, %c0_38, %c0_39], %52 {strides = array<i32>} : memref<1x4x128x32xbf16, #tpu.memory_space<vmem>>, vector<1x1x128x32xbf16>,
    return
  }
  func.func @transform_0(%arg0: i32, %arg1: i32) -> (i32, i32, i32) {
    %c0_i32 = arith.constant 0 : i32
    %c0_i32_0 = arith.constant 0 : i32
    return %arg0, %arg1, %c0_i32 : i32, i32, i32
  }
  func.func @transform_1(%arg0: i32, %arg1: i32) -> (i32, i32) {
    %c0_i32 = arith.constant 0 : i32
    %c0_i32_0 = arith.constant 0 : i32
    %c0_i32_1 = arith.constant 0 : i32
    return %c0_i32, %c0_i32_0 : i32, i32
  }
  func.func @transform_2(%arg0: i32, %arg1: i32) -> (i32, i32) {
    %c0_i32 = arith.constant 0 : i32
    %c0_i32_0 = arith.constant 0 : i32
    %c0_i32_1 = arith.constant 0 : i32
    return %c0_i32, %c0_i32_0 : i32, i32
  }
  func.func @transform_3(%arg0: i32, %arg1: i32) -> (i32, i32, i32, i32) {
    %c0_i32 = arith.constant 0 : i32
    %c0_i32_0 = arith.constant 0 : i32
    %c0_i32_1 = arith.constant 0 : i32
    return %arg0, %c0_i32, %arg1, %c0_i32_0 : i32, i32, i32, i32
  }
  func.func @transform_4(%arg0: i32, %arg1: i32) -> (i32, i32, i32, i32) {
    %c0_i32 = arith.constant 0 : i32
    %c0_i32_0 = arith.constant 0 : i32
    %c0_i32_1 = arith.constant 0 : i32
    return %arg0, %c0_i32, %c0_i32_0, %arg1 : i32, i32, i32, i32
  }
  func.func @transform_5(%arg0: i32, %arg1: i32) -> (i32, i32, i32, i32) {
    %c0_i32 = arith.constant 0 : i32
    %c0_i32_0 = arith.constant 0 : i32
    %c0_i32_1 = arith.constant 0 : i32
    return %arg0, %c0_i32, %arg1, %c0_i32_0 : i32, i32, i32, i32
  }
}

</mosaic_0001>

<llo_original>
// kernel: tpu_custom_call.1
$region0: #{tpu_custom_call.1}
  #allocation0 [shape = 'u32[]', space=smem, size = 0x4, offset = 0x4, fixed_abs, tag = 'smem constant byte address 0x4 - core index']
  #allocation1 [shape = 'u32[72,128]{1,0:T(1,128)}', space=vmem, size = 0x9000, scoped, tag = 'internal scratch']
  %s0 = inlined_call_operand.hbm [shape: f32[2,256,128], index: 0, kind: input, shape index: {}]
  %s1 = inlined_call_operand.hbm [shape: bf16[128,384], index: 1, kind: input, shape index: {}]
  %s2 = inlined_call_operand.hbm [shape: f32[1,384], index: 2, kind: input, shape index: {}]
  %s3 = inlined_call_operand.vmem [shape: bf16[2,4,256,32], index: 3, kind: output, shape index: {0}]
  %s4 = inlined_call_operand.hbm [shape: bf16[2,4,32,256], index: 4, kind: output, shape index: {1}]
  %s5 = inlined_call_operand.vmem [shape: bf16[2,4,256,32], index: 5, kind: output, shape index: {2}]
  %6 = xla_tuple %s3, %s4, %s5
  %s7 = sld [smem:[#allocation0]]
  $region147: #{tpu_custom_call.1} parent=0
    _
  %s9 = ssub.s32 1, %s7
  %s10 = scalar_select 0, %s9, %s7
  $region1: #{tpu_custom_call.1} parent=0
    #allocation2 [shape = 'u8[131072]{0}', space=vmem, size = 0x20000, scoped, tag = 'input window, operand 0']
    #allocation3 [shape = 's32[2]{0}', space=sflag, size = 0x8, scoped, tag = 'scoped memory for tpu_custom_call.1']
    #allocation4 [shape = 's32[2]{0}', space=sflag, size = 0x8, scoped, tag = 'scoped memory for tpu_custom_call.1']
    #allocation5 [shape = 'u8[98304]{0}', space=vmem, size = 0x18000, scoped, tag = 'input window, operand 1, single buffered']
    #allocation6 [shape = 's32[1]{0}', space=sflag, size = 0x4, scoped, tag = 'scoped memory for tpu_custom_call.1']
    #allocation7 [shape = 'u8[1536]{0}', space=vmem, size = 0x800, scoped, tag = 'input window, operand 2, single buffered']
    #allocation8 [shape = 'u8[262144]{0}', space=vmem, size = 0x40000, scoped, tag = 'output window, operand 0']
    #allocation9 [shape = 'u8[65536]{0}', space=vmem, size = 0x10000, scoped, tag = 'output window, operand 1']
    #allocation10 [shape = 'u8[262144]{0}', space=vmem, size = 0x40000, scoped, tag = 'output window, operand 2']
    %11 = vsyncpa [#allocation3], 0
    %s12 = scalar_lea.sflag [#allocation3], 1
    %13 = vsyncpa %s12, 0
    %14 = vsyncpa [#allocation6], 0
    %15 = vsyncpa [#allocation4], 0
    %s16 = scalar_lea.sflag [#allocation4], 1
    %17 = vsyncpa %s16, 0
    loop: start=0, step=1, limit=6
    $region2: #{tpu_custom_call.1} parent=1 // loop_pre_header
      _
    $region3: #{tpu_custom_call.1} parent=1 // loop_header
      %s19 = sphi 0, %s23
      %p20 = scmp.ge.s32.totalorder %s19, 6
      %s26 = sphi 0, %s38
      %s27 = sphi 0, %s34
      %s28 = sphi 0, %s26
      %s29 = sphi 0, %s27
      %s30 = sphi 0, %s28
      %s31 = sphi 0, %s29
      %s43 = sphi 0, %s45
      %s46 = sphi 0, %s43
      %s47 = sphi 0, %s46
      %s63 = sphi 0, %s47
      %s67 = sphi 0, %s67
      %s69 = sphi 0, %s67
      %s70 = sphi 0, %s69
      %s84 = sphi 0, %s70
      %s88 = sphi 0, %s88
      %s90 = sphi 0, %s88
      %s91 = sphi 0, %s90
      %s105 = sphi 0, %s91
      %s113 = sphi 0, %s115
      %s116 = sphi 0, %s113
      %s117 = sphi 0, %s116
      %s133 = sphi 0, %s117
      %s141 = sphi 0, %s143
      %s144 = sphi 0, %s141
      %s145 = sphi 0, %s144
      %s161 = sphi 0, %s145
      %s169 = sphi 0, %s171
      %s172 = sphi 0, %s169
      %s173 = sphi 0, %s172
      %s189 = sphi 0, %s173
    $region4: #{tpu_custom_call.1} parent=1 // loop_header_branch
      %22 = sbr.rel (%p20) target = $region8
    $region5: #{tpu_custom_call.1} parent=1 // loop_body
      %s24 = ssub.s32 %s19, 1
      %s25 = ssub.s32 %s19, 2
      %s32 = sadd.s32 1, %s27
      %p33 = scmp.ge.s32.totalorder %s32, 2
      %s34 = scalar_select %p33, 0, %s32
      %s35 = sadd.s32 1, %s26
      %s36 = scalar_select %p33, %s35, %s26
      %p37 = scmp.ge.s32.totalorder %s36, 2
      %s38 = scalar_select %p37, 0, %s36
      %s39 = ssub.s32 %s26, %s38
      %s40 = ssub.s32 %s27, %s34
      %s41 = sor.u32 %s39, %s40
      %p42 = scmp.eq.s32.totalorder %s41, 0
      %s44 = sadd.s32 %s43, 1
      %s45 = scalar_select %p42, %s43, %s44
      %p48 = pneg %p42
      %p49 = scmp.eq.s32.totalorder %s19, 3
      %p50 = por %p48, %p49
      %p51 = scmp.ne.s32.totalorder %s43, %s46
      %p52 = scmp.eq.s32.totalorder %s19, 0
      %p53 = por %p51, %p52
      %p54 = scmp.ne.s32.totalorder %s43, %s46
      %p55 = scmp.eq.s32.totalorder %s24, 3
      %p56 = por %p54, %p55
      %p57 = scmp.ne.s32.totalorder %s46, %s47
      %p58 = scmp.eq.s32.totalorder %s24, 0
      %p59 = por %p57, %p58
      %p60 = scmp.ne.s32.totalorder %s46, %s47
      %p61 = scmp.eq.s32.totalorder %s25, 3
      %p62 = por %p60, %p61
      %p64 = scmp.ne.s32.totalorder %s47, %s63
      %p65 = scmp.eq.s32.totalorder %s25, 0
      %p66 = por %p64, %p65
      %s68 = sadd.s32 %s67, 1
      %p71 = scmp.eq.s32.totalorder %s19, 3
      %p72 = scmp.ne.s32.totalorder %s67, %s69
      %p73 = scmp.eq.s32.totalorder %s19, 0
      %p74 = por %p72, %p73
      %p75 = scmp.ne.s32.totalorder %s67, %s69
      %p76 = scmp.eq.s32.totalorder %s24, 3
      %p77 = por %p75, %p76
      %p78 = scmp.ne.s32.totalorder %s69, %s70
      %p79 = scmp.eq.s32.totalorder %s24, 0
      %p80 = por %p78, %p79
      %p81 = scmp.ne.s32.totalorder %s69, %s70
      %p82 = scmp.eq.s32.totalorder %s25, 3
      %p83 = por %p81, %p82
      %p85 = scmp.ne.s32.totalorder %s70, %s84
      %p86 = scmp.eq.s32.totalorder %s25, 0
      %p87 = por %p85, %p86
      %s89 = sadd.s32 %s88, 1
      %p92 = scmp.eq.s32.totalorder %s19, 3
      %p93 = scmp.ne.s32.totalorder %s88, %s90
      %p94 = scmp.eq.s32.totalorder %s19, 0
      %p95 = por %p93, %p94
      %p96 = scmp.ne.s32.totalorder %s88, %s90
      %p97 = scmp.eq.s32.totalorder %s24, 3
      %p98 = por %p96, %p97
      %p99 = scmp.ne.s32.totalorder %s90, %s91
      %p100 = scmp.eq.s32.totalorder %s24, 0
      %p101 = por %p99, %p100
      %p102 = scmp.ne.s32.totalorder %s90, %s91
      %p103 = scmp.eq.s32.totalorder %s25, 3
      %p104 = por %p102, %p103
      %p106 = scmp.ne.s32.totalorder %s91, %s105
      %p107 = scmp.eq.s32.totalorder %s25, 0
      %p108 = por %p106, %p107
      %s109 = ssub.s32 %s26, %s38
      %s110 = ssub.s32 %s27, %s34
      %s111 = sor.u32 %s109, %s110
      %p112 = scmp.eq.s32.totalorder %s111, 0
      %s114 = sadd.s32 %s113, 1
      %s115 = scalar_select %p112, %s113, %s114
      %p118 = pneg %p112
      %p119 = scmp.eq.s32.totalorder %s19, 3
      %p120 = por %p118, %p119
      %p121 = scmp.ne.s32.totalorder %s113, %s116
      %p122 = scmp.eq.s32.totalorder %s19, 0
      %p123 = por %p121, %p122
      %p124 = scmp.ne.s32.totalorder %s113, %s116
      %p125 = scmp.eq.s32.totalorder %s24, 3
      %p126 = por %p124, %p125
      %p127 = scmp.ne.s32.totalorder %s116, %s117
      %p128 = scmp.eq.s32.totalorder %s24, 0
      %p129 = por %p127, %p128
      %p130 = scmp.ne.s32.totalorder %s116, %s117
      %p131 = scmp.eq.s32.totalorder %s25, 3
      %p132 = por %p130, %p131
      %p134 = scmp.ne.s32.totalorder %s117, %s133
      %p135 = scmp.eq.s32.totalorder %s25, 0
      %p136 = por %p134, %p135
      %s137 = ssub.s32 %s26, %s38
      %s138 = ssub.s32 %s27, %s34
      %s139 = sor.u32 %s137, %s138
      %p140 = scmp.eq.s32.totalorder %s139, 0
      %s142 = sadd.s32 %s141, 1
      %s143 = scalar_select %p140, %s141, %s142
      %p146 = pneg %p140
      %p147 = scmp.eq.s32.totalorder %s19, 3
      %p148 = por %p146, %p147
      %p149 = scmp.ne.s32.totalorder %s141, %s144
      %p150 = scmp.eq.s32.totalorder %s19, 0
      %p151 = por %p149, %p150
      %p152 = scmp.ne.s32.totalorder %s141, %s144
      %p153 = scmp.eq.s32.totalorder %s24, 3
      %p154 = por %p152, %p153
      %p155 = scmp.ne.s32.totalorder %s144, %s145
      %p156 = scmp.eq.s32.totalorder %s24, 0
      %p157 = por %p155, %p156
      %p158 = scmp.ne.s32.totalorder %s144, %s145
      %p159 = scmp.eq.s32.totalorder %s25, 3
      %p160 = por %p158, %p159
      %p162 = scmp.ne.s32.totalorder %s145, %s161
      %p163 = scmp.eq.s32.totalorder %s25, 0
      %p164 = por %p162, %p163
      %s165 = ssub.s32 %s26, %s38
      %s166 = ssub.s32 %s27, %s34
      %s167 = sor.u32 %s165, %s166
      %p168 = scmp.eq.s32.totalorder %s167, 0
      %s170 = sadd.s32 %s169, 1
      %s171 = scalar_select %p168, %s169, %s170
      %p174 = pneg %p168
      %p175 = scmp.eq.s32.totalorder %s19, 3
      %p176 = por %p174, %p175
      %p177 = scmp.ne.s32.totalorder %s169, %s172
      %p178 = scmp.eq.s32.totalorder %s19, 0
      %p179 = por %p177, %p178
      %p180 = scmp.ne.s32.totalorder %s169, %s172
      %p181 = scmp.eq.s32.totalorder %s24, 3
      %p182 = por %p180, %p181
      %p183 = scmp.ne.s32.totalorder %s172, %s173
      %p184 = scmp.eq.s32.totalorder %s24, 0
      %p185 = por %p183, %p184
      %p186 = scmp.ne.s32.totalorder %s172, %s173
      %p187 = scmp.eq.s32.totalorder %s25, 3
      %p188 = por %p186, %p187
      %p190 = scmp.ne.s32.totalorder %s173, %s189
      %p191 = scmp.eq.s32.totalorder %s25, 0
      %p192 = por %p190, %p191
      %p193 = scmp.le.s32.totalorder 1, %s19
      %p194 = scmp.lt.s32.totalorder %s19, 5
      %p195 = pnand %p193, %p194
      %p196 = pneg %p195
      // Predicated region
      $region9: #{tpu_custom_call.1} parent=5 // pred_check
        _
      $region10: #{tpu_custom_call.1} parent=5 // pred_check_branch
        %198 = sbr.rel (%p195) target = $region12
      $region11: #{tpu_custom_call.1} parent=5 // pred_region
        %s199 = ssub.s32 %s19, 1
        // Predicated region
        $region13: #{tpu_custom_call.1} parent=11 // pred_check
          %p200 = pneg %p80
        $region14: #{tpu_custom_call.1} parent=11 // pred_check_branch
          %202 = sbr.rel (%p200) target = $region16
        $region15: #{tpu_custom_call.1} parent=11 // pred_region
          %204 = vsyncadd [#allocation6], 0
          %s205 = sshll.u32 %s1, 4
          %s206 = int_to_ptr.hbm [resolvable:$true] %s205
          %s207 = sshll.u32 [#allocation5], 4
          %s208 = int_to_ptr.vmem [resolvable:$true] %s207
          %213 = dma.hbm_to_vmem [thread:$0]  %s206, 3072, %s208, [#allocation6], 192, 192, 12
        $region16: #{tpu_custom_call.1} parent=11 // pred_fallthru
          _
        // Predicated region
        $region17: #{tpu_custom_call.1} parent=11 // pred_check
          %p214 = pneg %p101
        $region18: #{tpu_custom_call.1} parent=11 // pred_check_branch
          %216 = sbr.rel (%p214) target = $region20
        $region19: #{tpu_custom_call.1} parent=11 // pred_region
          %218 = vsyncadd [#allocation6], 0
          %s220 = sshll.u32 %s2, 4
          %s221 = int_to_ptr.hbm [resolvable:$true] %s220
          %s222 = sshll.u32 [#allocation7], 4
          %s223 = int_to_ptr.vmem [resolvable:$true] %s222
          %225 = dma.hbm_to_vmem [thread:$0]  %s221, 48, %s223, [#allocation6]
        $region20: #{tpu_custom_call.1} parent=11 // pred_fallthru
          _
      $region12: #{tpu_custom_call.1} parent=5 // pred_fallthru
        _
      %p226 = scmp.lt.s32.totalorder %s19, 4
      // Predicated region
      $region21: #{tpu_custom_call.1} parent=5 // pred_check
        %p227 = pneg %p226
      $region22: #{tpu_custom_call.1} parent=5 // pred_check_branch
        %229 = sbr.rel (%p227) target = $region24
      $region23: #{tpu_custom_call.1} parent=5 // pred_region
        // Predicated region
        $region25: #{tpu_custom_call.1} parent=23 // pred_check
          %p230 = pneg %p53
        $region26: #{tpu_custom_call.1} parent=23 // pred_check_branch
          %232 = sbr.rel (%p230) target = $region28
        $region27: #{tpu_custom_call.1} parent=23 // pred_region
          %s233 = sand.u32 %s43, 1
          %s234 = scalar_lea.sflag [#allocation3], %s233
          %s235 = sand.u32 %s43, 1
          %s236 = smul.addr %s235, 128
          %s237 = scalar_lea.vmem [#allocation2], %s236
          %s238 = smul.u32 16, %s27
          %240 = vsyncadd %s234, 0
          %s241 = smul.addr %s26, 32
          %s242 = sadd.s32 %s238, %s241
          %s243 = smul.addr %s242, 8
          %s244 = scalar_lea.hbm %s0, %s243
          %s245 = sshll.u32 %s244, 4
          %s246 = int_to_ptr.hbm [resolvable:$true] %s245
          %s247 = sshll.u32 %s237, 4
          %s248 = int_to_ptr.vmem [resolvable:$true] %s247
          %253 = dma.hbm_to_vmem [thread:$0]  %s246, 2048, %s248, %s234, 128, 128, 8
        $region28: #{tpu_custom_call.1} parent=23 // pred_fallthru
          _
      $region24: #{tpu_custom_call.1} parent=5 // pred_fallthru
        _
      %p254 = scmp.le.s32.totalorder 1, %s19
      %p255 = scmp.lt.s32.totalorder %s19, 5
      %p256 = pnand %p254, %p255
      %p257 = pneg %p256
      // Predicated region
      $region29: #{tpu_custom_call.1} parent=5 // pred_check
        _
      $region30: #{tpu_custom_call.1} parent=5 // pred_check_branch
        %259 = sbr.rel (%p256) target = $region32
      $region31: #{tpu_custom_call.1} parent=5 // pred_region
        %s260 = ssub.s32 %s19, 1
        %s261 = sand.u32 %s46, 1
        %s262 = scalar_lea.sflag [#allocation3], %s261
        %s263 = sand.u32 %s46, 1
        %s264 = smul.addr %s263, 128
        %s265 = scalar_lea.vmem [#allocation2], %s264
        // Predicated region
        $region33: #{tpu_custom_call.1} parent=31 // pred_check
          %p266 = pneg %p59
        $region34: #{tpu_custom_call.1} parent=31 // pred_check_branch
          %268 = sbr.rel (%p266) target = $region36
        $region35: #{tpu_custom_call.1} parent=31 // pred_region
          %270 = dma.done %s262, 2048
        $region36: #{tpu_custom_call.1} parent=31 // pred_fallthru
          _
        // Predicated region
        $region37: #{tpu_custom_call.1} parent=31 // pred_check
          %p271 = pneg %p80
        $region38: #{tpu_custom_call.1} parent=31 // pred_check_branch
          %273 = sbr.rel (%p271) target = $region40
        $region39: #{tpu_custom_call.1} parent=31 // pred_region
          %275 = dma.done [#allocation6], 3072
        $region40: #{tpu_custom_call.1} parent=31 // pred_fallthru
          _
        // Predicated region
        $region41: #{tpu_custom_call.1} parent=31 // pred_check
          %p276 = pneg %p101
        $region42: #{tpu_custom_call.1} parent=31 // pred_check_branch
          %278 = sbr.rel (%p276) target = $region44
        $region43: #{tpu_custom_call.1} parent=31 // pred_region
          %280 = dma.done [#allocation6], 48
        $region44: #{tpu_custom_call.1} parent=31 // pred_fallthru
          _
        %s281 = sand.u32 %s46, 1
        %s282 = scalar_lea.sflag [#allocation3], %s281
        %s283 = sand.u32 %s46, 1
        %s284 = smul.addr %s283, 128
        %s285 = scalar_lea.vmem [#allocation2], %s284
        %p286 = pneg %p59
        %p287 = pneg %p56
        %p288 = pneg %p80
        %p289 = pneg %p77
        %p290 = pneg %p101
        %p291 = pneg %p98
        %p292 = pneg %p129
        %p293 = pneg %p126
        %s294 = sand.u32 %s116, 1
        %s295 = sand.u32 %s116, 1
        %s296 = smul.addr %s295, 256
        %s297 = scalar_lea.vmem [#allocation8], %s296
        %p298 = pneg %p157
        %p299 = pneg %p154
        %s300 = sand.u32 %s144, 1
        %s301 = scalar_lea.sflag [#allocation4], %s300
        %s302 = sand.u32 %s144, 1
        %s303 = smul.addr %s302, 64
        %s304 = scalar_lea.vmem [#allocation9], %s303
        %p305 = pneg %p185
        %p306 = pneg %p182
        %s307 = sand.u32 %s172, 1
        %s308 = sand.u32 %s172, 1
        %s309 = smul.addr %s308, 256
        %s310 = scalar_lea.vmem [#allocation10], %s309
        %s311 = smul.u32 16, %s29
        %s312 = smul.u32 16, %s29
        %s313 = smul.u32 16, %s29
        %v314 = vld [vmem:[%s265] sm:$0xff]
        %v315 = vld [vmem:[%s265 + $0x8] sm:$0xff]
        %v316 = vld [vmem:[%s265 + $0x10] sm:$0xff]
        %v317 = vld [vmem:[%s265 + $0x18] sm:$0xff]
        %v318 = vld [vmem:[%s265 + $0x20] sm:$0xff]
        %v319 = vld [vmem:[%s265 + $0x28] sm:$0xff]
        %v320 = vld [vmem:[%s265 + $0x30] sm:$0xff]
        %v321 = vld [vmem:[%s265 + $0x38] sm:$0xff]
        %v322 = vld [vmem:[%s265 + $0x40] sm:$0xff]
        %v323 = vld [vmem:[%s265 + $0x48] sm:$0xff]
        %v324 = vld [vmem:[%s265 + $0x50] sm:$0xff]
        %v325 = vld [vmem:[%s265 + $0x58] sm:$0xff]
        %v326 = vld [vmem:[%s265 + $0x60] sm:$0xff]
        %v327 = vld [vmem:[%s265 + $0x68] sm:$0xff]
        %v328 = vld [vmem:[%s265 + $0x70] sm:$0xff]
        %v329 = vld [vmem:[%s265 + $0x78] sm:$0xff]
        %v330 = vpack.c.bf16 %v315, %v314
        %v331 = vpack.c.bf16 %v317, %v316
        %v332 = vpack.c.bf16 %v319, %v318
        %v333 = vpack.c.bf16 %v321, %v320
        %v334 = vpack.c.bf16 %v323, %v322
        %v335 = vpack.c.bf16 %v325, %v324
        %v336 = vpack.c.bf16 %v327, %v326
        %v337 = vpack.c.bf16 %v329, %v328
        %v338 = vld [vmem:[#allocation5] sm:$0xff]
        %v339 = vld [vmem:[#allocation5 + $0x8] sm:$0xf]
        %v340 = vld [vmem:[#allocation5 + $0xc] sm:$0xff]
        %v341 = vld [vmem:[#allocation5 + $0x14] sm:$0xf]
        %v342 = vld [vmem:[#allocation5 + $0x18] sm:$0xff]
        %v343 = vld [vmem:[#allocation5 + $0x20] sm:$0xf]
        %v344 = vld [vmem:[#allocation5 + $0x24] sm:$0xff]
        %v345 = vld [vmem:[#allocation5 + $0x2c] sm:$0xf]
        %v346 = vld [vmem:[#allocation5 + $0x30] sm:$0xff]
        %v347 = vld [vmem:[#allocation5 + $0x38] sm:$0xf]
        %v348 = vld [vmem:[#allocation5 + $0x3c] sm:$0xff]
        %v349 = vld [vmem:[#allocation5 + $0x44] sm:$0xf]
        %v350 = vld [vmem:[#allocation5 + $0x48] sm:$0xff]
        %v351 = vld [vmem:[#allocation5 + $0x50] sm:$0xf]
        %v352 = vld [vmem:[#allocation5 + $0x54] sm:$0xff]
        %v353 = vld [vmem:[#allocation5 + $0x5c] sm:$0xf]
        %v354 = vld [vmem:[#allocation5 + $0x60] sm:$0xff]
        %v355 = vld [vmem:[#allocation5 + $0x68] sm:$0xf]
        %v356 = vld [vmem:[#allocation5 + $0x6c] sm:$0xff]
        %v357 = vld [vmem:[#allocation5 + $0x74] sm:$0xf]
        %v358 = vld [vmem:[#allocation5 + $0x78] sm:$0xff]
        %v359 = vld [vmem:[#allocation5 + $0x80] sm:$0xf]
        %v360 = vld [vmem:[#allocation5 + $0x84] sm:$0xff]
        %v361 = vld [vmem:[#allocation5 + $0x8c] sm:$0xf]
        %v362 = vld [vmem:[#allocation5 + $0x90] sm:$0xff]
        %v363 = vld [vmem:[#allocation5 + $0x98] sm:$0xf]
        %v364 = vld [vmem:[#allocation5 + $0x9c] sm:$0xff]
        %v365 = vld [vmem:[#allocation5 + $0xa4] sm:$0xf]
        %v366 = vld [vmem:[#allocation5 + $0xa8] sm:$0xff]
        %v367 = vld [vmem:[#allocation5 + $0xb0] sm:$0xf]
        %v368 = vld [vmem:[#allocation5 + $0xb4] sm:$0xff]
        %v369 = vld [vmem:[#allocation5 + $0xbc] sm:$0xf]
        %v370 = vld [vmem:[#allocation7] sm:$0x7]
        %v372 = vperm.slane %v370, 0
        %v373 = vperm.slane %v370, 1
        %v374 = vperm.slane %v370, 2
        %v410 = vunpack.c.l.b16 %v338
        %v411 = vunpack.c.h.b16 %v338
        %v412 = vunpack.c.l.b16 %v339
        %v413 = vunpack.c.l.b16 %v340
        %v414 = vunpack.c.h.b16 %v340
        %v415 = vunpack.c.l.b16 %v341
        %v416 = vunpack.c.l.b16 %v342
        %v417 = vunpack.c.h.b16 %v342
        %v418 = vunpack.c.l.b16 %v343
        %v419 = vunpack.c.l.b16 %v344
        %v420 = vunpack.c.h.b16 %v344
        %v421 = vunpack.c.l.b16 %v345
        %v422 = vunpack.c.l.b16 %v346
        %v423 = vunpack.c.h.b16 %v346
        %v424 = vunpack.c.l.b16 %v347
        %v425 = vunpack.c.l.b16 %v348
        %v426 = vunpack.c.h.b16 %v348
        %v427 = vunpack.c.l.b16 %v349
        %v428 = vunpack.c.l.b16 %v350
        %v429 = vunpack.c.h.b16 %v350
        %v430 = vunpack.c.l.b16 %v351
        %v431 = vunpack.c.l.b16 %v352
        %v432 = vunpack.c.h.b16 %v352
        %v433 = vunpack.c.l.b16 %v353
        %v434 = vunpack.c.l.b16 %v354
        %v435 = vunpack.c.h.b16 %v354
        %v436 = vunpack.c.l.b16 %v355
        %v437 = vunpack.c.l.b16 %v356
        %v438 = vunpack.c.h.b16 %v356
        %v439 = vunpack.c.l.b16 %v357
        %v440 = vunpack.c.l.b16 %v358
        %v441 = vunpack.c.h.b16 %v358
        %v442 = vunpack.c.l.b16 %v359
        %v443 = vunpack.c.l.b16 %v360
        %v444 = vunpack.c.h.b16 %v360
        %v445 = vunpack.c.l.b16 %v361
        %v446 = vunpack.c.l.b16 %v362
        %v447 = vunpack.c.h.b16 %v362
        %v448 = vunpack.c.l.b16 %v363
        %v449 = vunpack.c.l.b16 %v364
        %v450 = vunpack.c.h.b16 %v364
        %v451 = vunpack.c.l.b16 %v365
        %v452 = vunpack.c.l.b16 %v366
        %v453 = vunpack.c.h.b16 %v366
        %v454 = vunpack.c.l.b16 %v367
        %v455 = vunpack.c.l.b16 %v368
        %v456 = vunpack.c.h.b16 %v368
        %v457 = vunpack.c.l.b16 %v369
        %v458 = vpack.c.b16 %v413, %v410
        %v459 = vpack.c.b16 %v414, %v411
        %v460 = vpack.c.b16 %v415, %v412
        %v461 = vpack.c.b16 %v419, %v416
        %v462 = vpack.c.b16 %v420, %v417
        %v463 = vpack.c.b16 %v421, %v418
        %v464 = vpack.c.b16 %v425, %v422
        %v465 = vpack.c.b16 %v426, %v423
        %v466 = vpack.c.b16 %v427, %v424
        %v467 = vpack.c.b16 %v431, %v428
        %v468 = vpack.c.b16 %v432, %v429
        %v469 = vpack.c.b16 %v433, %v430
        %v470 = vpack.c.b16 %v437, %v434
        %v471 = vpack.c.b16 %v438, %v435
        %v472 = vpack.c.b16 %v439, %v436
        %v473 = vpack.c.b16 %v443, %v440
        %v474 = vpack.c.b16 %v444, %v441
        %v475 = vpack.c.b16 %v445, %v442
        %v476 = vpack.c.b16 %v449, %v446
        %v477 = vpack.c.b16 %v450, %v447
        %v478 = vpack.c.b16 %v451, %v448
        %v479 = vpack.c.b16 %v455, %v452
        %v480 = vpack.c.b16 %v456, %v453
        %v481 = vpack.c.b16 %v457, %v454
        %506 = vmatpush.bf16.msra.mxu0 %v479
        %507 = vmatpush.bf16.msra.mxu0 %v476
        %508 = vmatpush.bf16.msra.mxu0 %v473
        %509 = vmatpush.bf16.msra.mxu0 %v470
        %510 = vmatpush.bf16.msra.mxu0 %v467
        %511 = vmatpush.bf16.msra.mxu0 %v464
        %512 = vmatpush.bf16.msra.mxu0 %v461
        %513 = vmatpush.bf16.msra.mxu0 %v458
        %514 = vmatmul.bf16.gmra.mxu0 %v330
        %v515 = vpop.f32.mrf.mxu0
        %v516 = vadd.f32 %v372, %v515
        %v517 = vpop.f32.mrf.mxu0
        %v518 = vadd.f32 %v372, %v517
        %519 = vmatmul.bf16.gmra.mxu0 %v331
        %v520 = vpop.f32.mrf.mxu0
        %v521 = vadd.f32 %v372, %v520
        %v522 = vpop.f32.mrf.mxu0
        %v523 = vadd.f32 %v372, %v522
        %524 = vmatmul.bf16.gmra.mxu0 %v332
        %v525 = vpop.f32.mrf.mxu0
        %v526 = vadd.f32 %v372, %v525
        %v527 = vpop.f32.mrf.mxu0
        %v528 = vadd.f32 %v372, %v527
        %529 = vmatmul.bf16.gmra.mxu0 %v333
        %v530 = vpop.f32.mrf.mxu0
        %v531 = vadd.f32 %v372, %v530
        %v532 = vpop.f32.mrf.mxu0
        %v533 = vadd.f32 %v372, %v532
        %534 = vmatmul.bf16.gmra.mxu0 %v334
        %v535 = vpop.f32.mrf.mxu0
        %v536 = vadd.f32 %v372, %v535
        %v537 = vpop.f32.mrf.mxu0
        %v538 = vadd.f32 %v372, %v537
        %539 = vmatmul.bf16.gmra.mxu0 %v335
        %v540 = vpop.f32.mrf.mxu0
        %v541 = vadd.f32 %v372, %v540
        %v542 = vpop.f32.mrf.mxu0
        %v543 = vadd.f32 %v372, %v542
        %544 = vmatmul.bf16.gmra.mxu0 %v336
        %v545 = vpop.f32.mrf.mxu0
        %v546 = vadd.f32 %v372, %v545
        %v547 = vpop.f32.mrf.mxu0
        %v548 = vadd.f32 %v372, %v547
        %549 = vmatmul.bf16.gmra.mxu0 %v337
        %v550 = vpop.f32.mrf.mxu0
        %v551 = vadd.f32 %v372, %v550
        %v552 = vpop.f32.mrf.mxu0
        %v553 = vadd.f32 %v372, %v552
        %554 = vdwg.mxu0
        %555 = vmatpush.bf16.msra.mxu0 %v480
        %556 = vmatpush.bf16.msra.mxu0 %v477
        %557 = vmatpush.bf16.msra.mxu0 %v474
        %558 = vmatpush.bf16.msra.mxu0 %v471
        %559 = vmatpush.bf16.msra.mxu0 %v468
        %560 = vmatpush.bf16.msra.mxu0 %v465
        %561 = vmatpush.bf16.msra.mxu0 %v462
        %562 = vmatpush.bf16.msra.mxu0 %v459
        %563 = vmatmul.bf16.gmra.mxu0 %v330
        %v564 = vpop.f32.mrf.mxu0
        %v565 = vadd.f32 %v373, %v564
        %v566 = vpop.f32.mrf.mxu0
        %v567 = vadd.f32 %v373, %v566
        %568 = vmatmul.bf16.gmra.mxu0 %v331
        %v569 = vpop.f32.mrf.mxu0
        %v570 = vadd.f32 %v373, %v569
        %v571 = vpop.f32.mrf.mxu0
        %v572 = vadd.f32 %v373, %v571
        %573 = vmatmul.bf16.gmra.mxu0 %v332
        %v574 = vpop.f32.mrf.mxu0
        %v575 = vadd.f32 %v373, %v574
        %v576 = vpop.f32.mrf.mxu0
        %v577 = vadd.f32 %v373, %v576
        %578 = vmatmul.bf16.gmra.mxu0 %v333
        %v579 = vpop.f32.mrf.mxu0
        %v580 = vadd.f32 %v373, %v579
        %v581 = vpop.f32.mrf.mxu0
        %v582 = vadd.f32 %v373, %v581
        %583 = vmatmul.bf16.gmra.mxu0 %v334
        %v584 = vpop.f32.mrf.mxu0
        %v585 = vadd.f32 %v373, %v584
        %v586 = vpop.f32.mrf.mxu0
        %v587 = vadd.f32 %v373, %v586
        %588 = vmatmul.bf16.gmra.mxu0 %v335
        %v589 = vpop.f32.mrf.mxu0
        %v590 = vadd.f32 %v373, %v589
        %v591 = vpop.f32.mrf.mxu0
        %v592 = vadd.f32 %v373, %v591
        %593 = vmatmul.bf16.gmra.mxu0 %v336
        %v594 = vpop.f32.mrf.mxu0
        %v595 = vadd.f32 %v373, %v594
        %v596 = vpop.f32.mrf.mxu0
        %v597 = vadd.f32 %v373, %v596
        %598 = vmatmul.bf16.gmra.mxu0 %v337
        %v599 = vpop.f32.mrf.mxu0
        %v600 = vadd.f32 %v373, %v599
        %v601 = vpop.f32.mrf.mxu0
        %v602 = vadd.f32 %v373, %v601
        %603 = vdwg.mxu0
        %604 = vmatpush.bf16.msra.mxu0 %v481
        %605 = vmatpush.bf16.msra.mxu0 %v478
        %606 = vmatpush.bf16.msra.mxu0 %v475
        %607 = vmatpush.bf16.msra.mxu0 %v472
        %608 = vmatpush.bf16.msra.mxu0 %v469
        %609 = vmatpush.bf16.msra.mxu0 %v466
        %610 = vmatpush.bf16.msra.mxu0 %v463
        %611 = vmatpush.bf16.msra.mxu0 %v460
        %612 = vmatmul.bf16.gmra.mxu0 %v330
        %v613 = vpop.f32.mrf.mxu0
        %v614 = vadd.f32 %v374, %v613
        %v615 = vpop.f32.mrf.mxu0
        %v616 = vadd.f32 %v374, %v615
        %617 = vmatmul.bf16.gmra.mxu0 %v331
        %v618 = vpop.f32.mrf.mxu0
        %v619 = vadd.f32 %v374, %v618
        %v620 = vpop.f32.mrf.mxu0
        %v621 = vadd.f32 %v374, %v620
        %622 = vmatmul.bf16.gmra.mxu0 %v332
        %v623 = vpop.f32.mrf.mxu0
        %v624 = vadd.f32 %v374, %v623
        %v625 = vpop.f32.mrf.mxu0
        %v626 = vadd.f32 %v374, %v625
        %627 = vmatmul.bf16.gmra.mxu0 %v333
        %v628 = vpop.f32.mrf.mxu0
        %v629 = vadd.f32 %v374, %v628
        %v630 = vpop.f32.mrf.mxu0
        %v631 = vadd.f32 %v374, %v630
        %632 = vmatmul.bf16.gmra.mxu0 %v334
        %v633 = vpop.f32.mrf.mxu0
        %v634 = vadd.f32 %v374, %v633
        %v635 = vpop.f32.mrf.mxu0
        %v636 = vadd.f32 %v374, %v635
        %637 = vmatmul.bf16.gmra.mxu0 %v335
        %v638 = vpop.f32.mrf.mxu0
        %v639 = vadd.f32 %v374, %v638
        %v640 = vpop.f32.mrf.mxu0
        %v641 = vadd.f32 %v374, %v640
        %642 = vmatmul.bf16.gmra.mxu0 %v336
        %v643 = vpop.f32.mrf.mxu0
        %v644 = vadd.f32 %v374, %v643
        %v645 = vpop.f32.mrf.mxu0
        %v646 = vadd.f32 %v374, %v645
        %647 = vmatmul.bf16.gmra.mxu0 %v337
        %v648 = vpop.f32.mrf.mxu0
        %v649 = vadd.f32 %v374, %v648
        %v650 = vpop.f32.mrf.mxu0
        %v651 = vadd.f32 %v374, %v650
        %652 = vdwg.mxu0
        %v653 = vmul.f32 %v516, 0.17677669
        %v654 = vmul.f32 %v518, 0.17677669
        %v655 = vmul.f32 %v521, 0.17677669
        %v656 = vmul.f32 %v523, 0.17677669
        %v657 = vmul.f32 %v526, 0.17677669
        %v658 = vmul.f32 %v528, 0.17677669
        %v659 = vmul.f32 %v531, 0.17677669
        %v660 = vmul.f32 %v533, 0.17677669
        %v661 = vmul.f32 %v536, 0.17677669
        %v662 = vmul.f32 %v538, 0.17677669
        %v663 = vmul.f32 %v541, 0.17677669
        %v664 = vmul.f32 %v543, 0.17677669
        %v665 = vmul.f32 %v546, 0.17677669
        %v666 = vmul.f32 %v548, 0.17677669
        %v667 = vmul.f32 %v551, 0.17677669
        %v668 = vmul.f32 %v553, 0.17677669
        %v669 = vpack.c.bf16 %v653, %v653
        %v670 = vpack.c.bf16 %v654, %v654
        %v671 = vpack.c.bf16 %v655, %v655
        %v672 = vpack.c.bf16 %v656, %v656
        %v673 = vpack.c.bf16 %v657, %v657
        %v674 = vpack.c.bf16 %v658, %v658
        %v675 = vpack.c.bf16 %v659, %v659
        %v676 = vpack.c.bf16 %v660, %v660
        %v677 = vpack.c.bf16 %v661, %v661
        %v678 = vpack.c.bf16 %v662, %v662
        %v679 = vpack.c.bf16 %v663, %v663
        %v680 = vpack.c.bf16 %v664, %v664
        %v681 = vpack.c.bf16 %v665, %v665
        %v682 = vpack.c.bf16 %v666, %v666
        %v683 = vpack.c.bf16 %v667, %v667
        %v684 = vpack.c.bf16 %v668, %v668
        %v685 = vpack.c.bf16 %v614, %v614
        %v686 = vpack.c.bf16 %v616, %v616
        %v687 = vpack.c.bf16 %v619, %v619
        %v688 = vpack.c.bf16 %v621, %v621
        %v689 = vpack.c.bf16 %v624, %v624
        %v690 = vpack.c.bf16 %v626, %v626
        %v691 = vpack.c.bf16 %v629, %v629
        %v692 = vpack.c.bf16 %v631, %v631
        %v693 = vpack.c.bf16 %v634, %v634
        %v694 = vpack.c.bf16 %v636, %v636
        %v695 = vpack.c.bf16 %v639, %v639
        %v696 = vpack.c.bf16 %v641, %v641
        %v697 = vpack.c.bf16 %v644, %v644
        %v698 = vpack.c.bf16 %v646, %v646
        %v699 = vpack.c.bf16 %v649, %v649
        %v700 = vpack.c.bf16 %v651, %v651
        %701 = vxpose.xlu0.b32.start [1/16] %v565, 128
        %702 = vxpose.xlu0.b32.cont [2/16] %v567, 128
        %703 = vxpose.xlu0.b32.cont [3/16] %v570, 128
        %704 = vxpose.xlu0.b32.cont [4/16] %v572, 128
        %705 = vxpose.xlu0.b32.cont [5/16] %v575, 128
        %706 = vxpose.xlu0.b32.cont [6/16] %v577, 128
        %707 = vxpose.xlu0.b32.cont [7/16] %v580, 128
        %708 = vxpose.xlu0.b32.cont [8/16] %v582, 128
        %709 = vxpose.xlu0.b32.cont [9/16] %v585, 128
        %710 = vxpose.xlu0.b32.cont [10/16] %v587, 128
        %711 = vxpose.xlu0.b32.cont [11/16] %v590, 128
        %712 = vxpose.xlu0.b32.cont [12/16] %v592, 128
        %713 = vxpose.xlu0.b32.cont [13/16] %v595, 128
        %714 = vxpose.xlu0.b32.cont [14/16] %v597, 128
        %715 = vxpose.xlu0.b32.cont [15/16] %v600, 128
        %716 = vxpose.xlu0.b32.end [16/16] %v602, 128
        %v717 = vpop.trf.xlu0
        %v718 = vpop.trf.xlu0
        %v719 = vpop.trf.xlu0
        %v720 = vpop.trf.xlu0
        %v721 = vpop.trf.xlu0
        %v722 = vpop.trf.xlu0
        %v723 = vpop.trf.xlu0
        %v724 = vpop.trf.xlu0
        %v725 = vpop.trf.xlu0
        %v726 = vpop.trf.xlu0
        %v727 = vpop.trf.xlu0
        %v728 = vpop.trf.xlu0
        %v729 = vpop.trf.xlu0
        %v730 = vpop.trf.xlu0
        %v731 = vpop.trf.xlu0
        %v732 = vpop.trf.xlu0
        %v733 = vpack.c.bf16 %v717, %v717
        %v734 = vpack.c.bf16 %v718, %v718
        %v735 = vpack.c.bf16 %v719, %v719
        %v736 = vpack.c.bf16 %v720, %v720
        %v737 = vpack.c.bf16 %v721, %v721
        %v738 = vpack.c.bf16 %v722, %v722
        %v739 = vpack.c.bf16 %v723, %v723
        %v740 = vpack.c.bf16 %v724, %v724
        %v741 = vpack.c.bf16 %v725, %v725
        %v742 = vpack.c.bf16 %v726, %v726
        %v743 = vpack.c.bf16 %v727, %v727
        %v744 = vpack.c.bf16 %v728, %v728
        %v745 = vpack.c.bf16 %v729, %v729
        %v746 = vpack.c.bf16 %v730, %v730
        %v747 = vpack.c.bf16 %v731, %v731
        %v748 = vpack.c.bf16 %v732, %v732
        %749 = vst [vmem:[%s304] sm:$0xf] %v733
        %750 = vst [vmem:[%s304 + $0x4] sm:$0xf] %v734
        %751 = vst [vmem:[%s304 + $0x8] sm:$0xf] %v735
        %752 = vst [vmem:[%s304 + $0xc] sm:$0xf] %v736
        %753 = vst [vmem:[%s304 + $0x10] sm:$0xf] %v737
        %754 = vst [vmem:[%s304 + $0x14] sm:$0xf] %v738
        %755 = vst [vmem:[%s304 + $0x18] sm:$0xf] %v739
        %756 = vst [vmem:[%s304 + $0x1c] sm:$0xf] %v740
        %757 = vst [vmem:[%s304 + $0x20] sm:$0xf] %v741
        %758 = vst [vmem:[%s304 + $0x24] sm:$0xf] %v742
        %759 = vst [vmem:[%s304 + $0x28] sm:$0xf] %v743
        %760 = vst [vmem:[%s304 + $0x2c] sm:$0xf] %v744
        %761 = vst [vmem:[%s304 + $0x30] sm:$0xf] %v745
        %762 = vst [vmem:[%s304 + $0x34] sm:$0xf] %v746
        %763 = vst [vmem:[%s304 + $0x38] sm:$0xf] %v747
        %764 = vst [vmem:[%s304 + $0x3c] sm:$0xf] %v748
        %vm765 = vcmask 257024
        %766 = vst.msk [vmem:[%s297] sm:$0xf] %vm765, %v669
        %767 = vst.msk [vmem:[%s297 + $0x4] sm:$0xf] %vm765, %v670
        %768 = vst.msk [vmem:[%s297 + $0x8] sm:$0xf] %vm765, %v671
        %769 = vst.msk [vmem:[%s297 + $0xc] sm:$0xf] %vm765, %v672
        %770 = vst.msk [vmem:[%s297 + $0x10] sm:$0xf] %vm765, %v673
        %771 = vst.msk [vmem:[%s297 + $0x14] sm:$0xf] %vm765, %v674
        %772 = vst.msk [vmem:[%s297 + $0x18] sm:$0xf] %vm765, %v675
        %773 = vst.msk [vmem:[%s297 + $0x1c] sm:$0xf] %vm765, %v676
        %774 = vst.msk [vmem:[%s297 + $0x20] sm:$0xf] %vm765, %v677
        %775 = vst.msk [vmem:[%s297 + $0x24] sm:$0xf] %vm765, %v678
        %776 = vst.msk [vmem:[%s297 + $0x28] sm:$0xf] %vm765, %v679
        %777 = vst.msk [vmem:[%s297 + $0x2c] sm:$0xf] %vm765, %v680
        %778 = vst.msk [vmem:[%s297 + $0x30] sm:$0xf] %vm765, %v681
        %779 = vst.msk [vmem:[%s297 + $0x34] sm:$0xf] %vm765, %v682
        %780 = vst.msk [vmem:[%s297 + $0x38] sm:$0xf] %vm765, %v683
        %781 = vst.msk [vmem:[%s297 + $0x3c] sm:$0xf] %vm765, %v684
        %782 = vst.msk [vmem:[%s310] sm:$0xf] %vm765, %v685
        %783 = vst.msk [vmem:[%s310 + $0x4] sm:$0xf] %vm765, %v686
        %784 = vst.msk [vmem:[%s310 + $0x8] sm:$0xf] %vm765, %v687
        %785 = vst.msk [vmem:[%s310 + $0xc] sm:$0xf] %vm765, %v688
        %786 = vst.msk [vmem:[%s310 + $0x10] sm:$0xf] %vm765, %v689
        %787 = vst.msk [vmem:[%s310 + $0x14] sm:$0xf] %vm765, %v690
        %788 = vst.msk [vmem:[%s310 + $0x18] sm:$0xf] %vm765, %v691
        %789 = vst.msk [vmem:[%s310 + $0x1c] sm:$0xf] %vm765, %v692
        %790 = vst.msk [vmem:[%s310 + $0x20] sm:$0xf] %vm765, %v693
        %791 = vst.msk [vmem:[%s310 + $0x24] sm:$0xf] %vm765, %v694
        %792 = vst.msk [vmem:[%s310 + $0x28] sm:$0xf] %vm765, %v695
        %793 = vst.msk [vmem:[%s310 + $0x2c] sm:$0xf] %vm765, %v696
        %794 = vst.msk [vmem:[%s310 + $0x30] sm:$0xf] %vm765, %v697
        %795 = vst.msk [vmem:[%s310 + $0x34] sm:$0xf] %vm765, %v698
        %796 = vst.msk [vmem:[%s310 + $0x38] sm:$0xf] %vm765, %v699
        %797 = vst.msk [vmem:[%s310 + $0x3c] sm:$0xf] %vm765, %v700
        %814 = vrot.lane.b32.xlu0 %v669, 96
        %v815 = vpop.permute.xlu0 %814
        %816 = vrot.lane.b32.xlu0 %v670, 96
        %v817 = vpop.permute.xlu0 %816
        %818 = vrot.lane.b32.xlu0 %v671, 96
        %v819 = vpop.permute.xlu0 %818
        %820 = vrot.lane.b32.xlu0 %v672, 96
        %v821 = vpop.permute.xlu0 %820
        %822 = vrot.lane.b32.xlu0 %v673, 96
        %v823 = vpop.permute.xlu0 %822
        %824 = vrot.lane.b32.xlu0 %v674, 96
        %v825 = vpop.permute.xlu0 %824
        %826 = vrot.lane.b32.xlu0 %v675, 96
        %v827 = vpop.permute.xlu0 %826
        %828 = vrot.lane.b32.xlu0 %v676, 96
        %v829 = vpop.permute.xlu0 %828
        %830 = vrot.lane.b32.xlu0 %v677, 96
        %v831 = vpop.permute.xlu0 %830
        %832 = vrot.lane.b32.xlu0 %v678, 96
        %v833 = vpop.permute.xlu0 %832
        %834 = vrot.lane.b32.xlu0 %v679, 96
        %v835 = vpop.permute.xlu0 %834
        %836 = vrot.lane.b32.xlu0 %v680, 96
        %v837 = vpop.permute.xlu0 %836
        %838 = vrot.lane.b32.xlu0 %v681, 96
        %v839 = vpop.permute.xlu0 %838
        %840 = vrot.lane.b32.xlu0 %v682, 96
        %v841 = vpop.permute.xlu0 %840
        %842 = vrot.lane.b32.xlu0 %v683, 96
        %v843 = vpop.permute.xlu0 %842
        %844 = vrot.lane.b32.xlu0 %v684, 96
        %v845 = vpop.permute.xlu0 %844
        %s862 = scalar_lea.vmem %s297, 64 [#allocation8]
        %863 = vst.msk [vmem:[%s862] sm:$0xf] %vm765, %v815
        %864 = vst.msk [vmem:[%s862 + $0x4] sm:$0xf] %vm765, %v817
        %865 = vst.msk [vmem:[%s862 + $0x8] sm:$0xf] %vm765, %v819
        %866 = vst.msk [vmem:[%s862 + $0xc] sm:$0xf] %vm765, %v821
        %867 = vst.msk [vmem:[%s862 + $0x10] sm:$0xf] %vm765, %v823
        %868 = vst.msk [vmem:[%s862 + $0x14] sm:$0xf] %vm765, %v825
        %869 = vst.msk [vmem:[%s862 + $0x18] sm:$0xf] %vm765, %v827
        %870 = vst.msk [vmem:[%s862 + $0x1c] sm:$0xf] %vm765, %v829
        %871 = vst.msk [vmem:[%s862 + $0x20] sm:$0xf] %vm765, %v831
        %872 = vst.msk [vmem:[%s862 + $0x24] sm:$0xf] %vm765, %v833
        %873 = vst.msk [vmem:[%s862 + $0x28] sm:$0xf] %vm765, %v835
        %874 = vst.msk [vmem:[%s862 + $0x2c] sm:$0xf] %vm765, %v837
        %875 = vst.msk [vmem:[%s862 + $0x30] sm:$0xf] %vm765, %v839
        %876 = vst.msk [vmem:[%s862 + $0x34] sm:$0xf] %vm765, %v841
        %877 = vst.msk [vmem:[%s862 + $0x38] sm:$0xf] %vm765, %v843
        %878 = vst.msk [vmem:[%s862 + $0x3c] sm:$0xf] %vm765, %v845
        %895 = vrot.lane.b32.xlu0 %v685, 96
        %v896 = vpop.permute.xlu0 %895
        %897 = vrot.lane.b32.xlu0 %v686, 96
        %v898 = vpop.permute.xlu0 %897
        %899 = vrot.lane.b32.xlu0 %v687, 96
        %v900 = vpop.permute.xlu0 %899
        %901 = vrot.lane.b32.xlu0 %v688, 96
        %v902 = vpop.permute.xlu0 %901
        %903 = vrot.lane.b32.xlu0 %v689, 96
        %v904 = vpop.permute.xlu0 %903
        %905 = vrot.lane.b32.xlu0 %v690, 96
        %v906 = vpop.permute.xlu0 %905
        %907 = vrot.lane.b32.xlu0 %v691, 96
        %v908 = vpop.permute.xlu0 %907
        %909 = vrot.lane.b32.xlu0 %v692, 96
        %v910 = vpop.permute.xlu0 %909
        %911 = vrot.lane.b32.xlu0 %v693, 96
        %v912 = vpop.permute.xlu0 %911
        %913 = vrot.lane.b32.xlu0 %v694, 96
        %v914 = vpop.permute.xlu0 %913
        %915 = vrot.lane.b32.xlu0 %v695, 96
        %v916 = vpop.permute.xlu0 %915
        %917 = vrot.lane.b32.xlu0 %v696, 96
        %v918 = vpop.permute.xlu0 %917
        %919 = vrot.lane.b32.xlu0 %v697, 96
        %v920 = vpop.permute.xlu0 %919
        %921 = vrot.lane.b32.xlu0 %v698, 96
        %v922 = vpop.permute.xlu0 %921
        %923 = vrot.lane.b32.xlu0 %v699, 96
        %v924 = vpop.permute.xlu0 %923
        %925 = vrot.lane.b32.xlu0 %v700, 96
        %v926 = vpop.permute.xlu0 %925
        %s943 = scalar_lea.vmem %s310, 64 [#allocation10]
        %944 = vst.msk [vmem:[%s943] sm:$0xf] %vm765, %v896
        %945 = vst.msk [vmem:[%s943 + $0x4] sm:$0xf] %vm765, %v898
        %946 = vst.msk [vmem:[%s943 + $0x8] sm:$0xf] %vm765, %v900
        %947 = vst.msk [vmem:[%s943 + $0xc] sm:$0xf] %vm765, %v902
        %948 = vst.msk [vmem:[%s943 + $0x10] sm:$0xf] %vm765, %v904
        %949 = vst.msk [vmem:[%s943 + $0x14] sm:$0xf] %vm765, %v906
        %950 = vst.msk [vmem:[%s943 + $0x18] sm:$0xf] %vm765, %v908
        %951 = vst.msk [vmem:[%s943 + $0x1c] sm:$0xf] %vm765, %v910
        %952 = vst.msk [vmem:[%s943 + $0x20] sm:$0xf] %vm765, %v912
        %953 = vst.msk [vmem:[%s943 + $0x24] sm:$0xf] %vm765, %v914
        %954 = vst.msk [vmem:[%s943 + $0x28] sm:$0xf] %vm765, %v916
        %955 = vst.msk [vmem:[%s943 + $0x2c] sm:$0xf] %vm765, %v918
        %956 = vst.msk [vmem:[%s943 + $0x30] sm:$0xf] %vm765, %v920
        %957 = vst.msk [vmem:[%s943 + $0x34] sm:$0xf] %vm765, %v922
        %958 = vst.msk [vmem:[%s943 + $0x38] sm:$0xf] %vm765, %v924
        %959 = vst.msk [vmem:[%s943 + $0x3c] sm:$0xf] %vm765, %v926
        %960 = vrot.lane.b32.xlu0 %v669, 64
        %v961 = vpop.permute.xlu0 %960
        %962 = vrot.lane.b32.xlu0 %v670, 64
        %v963 = vpop.permute.xlu0 %962
        %964 = vrot.lane.b32.xlu0 %v671, 64
        %v965 = vpop.permute.xlu0 %964
        %966 = vrot.lane.b32.xlu0 %v672, 64
        %v967 = vpop.permute.xlu0 %966
        %968 = vrot.lane.b32.xlu0 %v673, 64
        %v969 = vpop.permute.xlu0 %968
        %970 = vrot.lane.b32.xlu0 %v674, 64
        %v971 = vpop.permute.xlu0 %970
        %972 = vrot.lane.b32.xlu0 %v675, 64
        %v973 = vpop.permute.xlu0 %972
        %974 = vrot.lane.b32.xlu0 %v676, 64
        %v975 = vpop.permute.xlu0 %974
        %976 = vrot.lane.b32.xlu0 %v677, 64
        %v977 = vpop.permute.xlu0 %976
        %978 = vrot.lane.b32.xlu0 %v678, 64
        %v979 = vpop.permute.xlu0 %978
        %980 = vrot.lane.b32.xlu0 %v679, 64
        %v981 = vpop.permute.xlu0 %980
        %982 = vrot.lane.b32.xlu0 %v680, 64
        %v983 = vpop.permute.xlu0 %982
        %984 = vrot.lane.b32.xlu0 %v681, 64
        %v985 = vpop.permute.xlu0 %984
        %986 = vrot.lane.b32.xlu0 %v682, 64
        %v987 = vpop.permute.xlu0 %986
        %988 = vrot.lane.b32.xlu0 %v683, 64
        %v989 = vpop.permute.xlu0 %988
        %990 = vrot.lane.b32.xlu0 %v684, 64
        %v991 = vpop.permute.xlu0 %990
        %s1008 = scalar_lea.vmem %s297, 128 [#allocation8]
        %1009 = vst.msk [vmem:[%s1008] sm:$0xf] %vm765, %v961
        %1010 = vst.msk [vmem:[%s1008 + $0x4] sm:$0xf] %vm765, %v963
        %1011 = vst.msk [vmem:[%s1008 + $0x8] sm:$0xf] %vm765, %v965
        %1012 = vst.msk [vmem:[%s1008 + $0xc] sm:$0xf] %vm765, %v967
        %1013 = vst.msk [vmem:[%s1008 + $0x10] sm:$0xf] %vm765, %v969
        %1014 = vst.msk [vmem:[%s1008 + $0x14] sm:$0xf] %vm765, %v971
        %1015 = vst.msk [vmem:[%s1008 + $0x18] sm:$0xf] %vm765, %v973
        %1016 = vst.msk [vmem:[%s1008 + $0x1c] sm:$0xf] %vm765, %v975
        %1017 = vst.msk [vmem:[%s1008 + $0x20] sm:$0xf] %vm765, %v977
        %1018 = vst.msk [vmem:[%s1008 + $0x24] sm:$0xf] %vm765, %v979
        %1019 = vst.msk [vmem:[%s1008 + $0x28] sm:$0xf] %vm765, %v981
        %1020 = vst.msk [vmem:[%s1008 + $0x2c] sm:$0xf] %vm765, %v983
        %1021 = vst.msk [vmem:[%s1008 + $0x30] sm:$0xf] %vm765, %v985
        %1022 = vst.msk [vmem:[%s1008 + $0x34] sm:$0xf] %vm765, %v987
        %1023 = vst.msk [vmem:[%s1008 + $0x38] sm:$0xf] %vm765, %v989
        %1024 = vst.msk [vmem:[%s1008 + $0x3c] sm:$0xf] %vm765, %v991
        %1025 = vrot.lane.b32.xlu0 %v685, 64
        %v1026 = vpop.permute.xlu0 %1025
        %1027 = vrot.lane.b32.xlu0 %v686, 64
        %v1028 = vpop.permute.xlu0 %1027
        %1029 = vrot.lane.b32.xlu0 %v687, 64
        %v1030 = vpop.permute.xlu0 %1029
        %1031 = vrot.lane.b32.xlu0 %v688, 64
        %v1032 = vpop.permute.xlu0 %1031
        %1033 = vrot.lane.b32.xlu0 %v689, 64
        %v1034 = vpop.permute.xlu0 %1033
        %1035 = vrot.lane.b32.xlu0 %v690, 64
        %v1036 = vpop.permute.xlu0 %1035
        %1037 = vrot.lane.b32.xlu0 %v691, 64
        %v1038 = vpop.permute.xlu0 %1037
        %1039 = vrot.lane.b32.xlu0 %v692, 64
        %v1040 = vpop.permute.xlu0 %1039
        %1041 = vrot.lane.b32.xlu0 %v693, 64
        %v1042 = vpop.permute.xlu0 %1041
        %1043 = vrot.lane.b32.xlu0 %v694, 64
        %v1044 = vpop.permute.xlu0 %1043
        %1045 = vrot.lane.b32.xlu0 %v695, 64
        %v1046 = vpop.permute.xlu0 %1045
        %1047 = vrot.lane.b32.xlu0 %v696, 64
        %v1048 = vpop.permute.xlu0 %1047
        %1049 = vrot.lane.b32.xlu0 %v697, 64
        %v1050 = vpop.permute.xlu0 %1049
        %1051 = vrot.lane.b32.xlu0 %v698, 64
        %v1052 = vpop.permute.xlu0 %1051
        %1053 = vrot.lane.b32.xlu0 %v699, 64
        %v1054 = vpop.permute.xlu0 %1053
        %1055 = vrot.lane.b32.xlu0 %v700, 64
        %v1056 = vpop.permute.xlu0 %1055
        %s1073 = scalar_lea.vmem %s310, 128 [#allocation10]
        %1074 = vst.msk [vmem:[%s1073] sm:$0xf] %vm765, %v1026
        %1075 = vst.msk [vmem:[%s1073 + $0x4] sm:$0xf] %vm765, %v1028
        %1076 = vst.msk [vmem:[%s1073 + $0x8] sm:$0xf] %vm765, %v1030
        %1077 = vst.msk [vmem:[%s1073 + $0xc] sm:$0xf] %vm765, %v1032
        %1078 = vst.msk [vmem:[%s1073 + $0x10] sm:$0xf] %vm765, %v1034
        %1079 = vst.msk [vmem:[%s1073 + $0x14] sm:$0xf] %vm765, %v1036
        %1080 = vst.msk [vmem:[%s1073 + $0x18] sm:$0xf] %vm765, %v1038
        %1081 = vst.msk [vmem:[%s1073 + $0x1c] sm:$0xf] %vm765, %v1040
        %1082 = vst.msk [vmem:[%s1073 + $0x20] sm:$0xf] %vm765, %v1042
        %1083 = vst.msk [vmem:[%s1073 + $0x24] sm:$0xf] %vm765, %v1044
        %1084 = vst.msk [vmem:[%s1073 + $0x28] sm:$0xf] %vm765, %v1046
        %1085 = vst.msk [vmem:[%s1073 + $0x2c] sm:$0xf] %vm765, %v1048
        %1086 = vst.msk [vmem:[%s1073 + $0x30] sm:$0xf] %vm765, %v1050
        %1087 = vst.msk [vmem:[%s1073 + $0x34] sm:$0xf] %vm765, %v1052
        %1088 = vst.msk [vmem:[%s1073 + $0x38] sm:$0xf] %vm765, %v1054
        %1089 = vst.msk [vmem:[%s1073 + $0x3c] sm:$0xf] %vm765, %v1056
        %1090 = vrot.lane.b32.xlu0 %v669, 32
        %v1091 = vpop.permute.xlu0 %1090
        %1092 = vrot.lane.b32.xlu0 %v670, 32
        %v1093 = vpop.permute.xlu0 %1092
        %1094 = vrot.lane.b32.xlu0 %v671, 32
        %v1095 = vpop.permute.xlu0 %1094
        %1096 = vrot.lane.b32.xlu0 %v672, 32
        %v1097 = vpop.permute.xlu0 %1096
        %1098 = vrot.lane.b32.xlu0 %v673, 32
        %v1099 = vpop.permute.xlu0 %1098
        %1100 = vrot.lane.b32.xlu0 %v674, 32
        %v1101 = vpop.permute.xlu0 %1100
        %1102 = vrot.lane.b32.xlu0 %v675, 32
        %v1103 = vpop.permute.xlu0 %1102
        %1104 = vrot.lane.b32.xlu0 %v676, 32
        %v1105 = vpop.permute.xlu0 %1104
        %1106 = vrot.lane.b32.xlu0 %v677, 32
        %v1107 = vpop.permute.xlu0 %1106
        %1108 = vrot.lane.b32.xlu0 %v678, 32
        %v1109 = vpop.permute.xlu0 %1108
        %1110 = vrot.lane.b32.xlu0 %v679, 32
        %v1111 = vpop.permute.xlu0 %1110
        %1112 = vrot.lane.b32.xlu0 %v680, 32
        %v1113 = vpop.permute.xlu0 %1112
        %1114 = vrot.lane.b32.xlu0 %v681, 32
        %v1115 = vpop.permute.xlu0 %1114
        %1116 = vrot.lane.b32.xlu0 %v682, 32
        %v1117 = vpop.permute.xlu0 %1116
        %1118 = vrot.lane.b32.xlu0 %v683, 32
        %v1119 = vpop.permute.xlu0 %1118
        %1120 = vrot.lane.b32.xlu0 %v684, 32
        %v1121 = vpop.permute.xlu0 %1120
        %s1138 = scalar_lea.vmem %s297, 192 [#allocation8]
        %1139 = vst.msk [vmem:[%s1138] sm:$0xf] %vm765, %v1091
        %1140 = vst.msk [vmem:[%s1138 + $0x4] sm:$0xf] %vm765, %v1093
        %1141 = vst.msk [vmem:[%s1138 + $0x8] sm:$0xf] %vm765, %v1095
        %1142 = vst.msk [vmem:[%s1138 + $0xc] sm:$0xf] %vm765, %v1097
        %1143 = vst.msk [vmem:[%s1138 + $0x10] sm:$0xf] %vm765, %v1099
        %1144 = vst.msk [vmem:[%s1138 + $0x14] sm:$0xf] %vm765, %v1101
        %1145 = vst.msk [vmem:[%s1138 + $0x18] sm:$0xf] %vm765, %v1103
        %1146 = vst.msk [vmem:[%s1138 + $0x1c] sm:$0xf] %vm765, %v1105
        %1147 = vst.msk [vmem:[%s1138 + $0x20] sm:$0xf] %vm765, %v1107
        %1148 = vst.msk [vmem:[%s1138 + $0x24] sm:$0xf] %vm765, %v1109
        %1149 = vst.msk [vmem:[%s1138 + $0x28] sm:$0xf] %vm765, %v1111
        %1150 = vst.msk [vmem:[%s1138 + $0x2c] sm:$0xf] %vm765, %v1113
        %1151 = vst.msk [vmem:[%s1138 + $0x30] sm:$0xf] %vm765, %v1115
        %1152 = vst.msk [vmem:[%s1138 + $0x34] sm:$0xf] %vm765, %v1117
        %1153 = vst.msk [vmem:[%s1138 + $0x38] sm:$0xf] %vm765, %v1119
        %1154 = vst.msk [vmem:[%s1138 + $0x3c] sm:$0xf] %vm765, %v1121
        %1155 = vrot.lane.b32.xlu0 %v685, 32
        %v1156 = vpop.permute.xlu0 %1155
        %1157 = vrot.lane.b32.xlu0 %v686, 32
        %v1158 = vpop.permute.xlu0 %1157
        %1159 = vrot.lane.b32.xlu0 %v687, 32
        %v1160 = vpop.permute.xlu0 %1159
        %1161 = vrot.lane.b32.xlu0 %v688, 32
        %v1162 = vpop.permute.xlu0 %1161
        %1163 = vrot.lane.b32.xlu0 %v689, 32
        %v1164 = vpop.permute.xlu0 %1163
        %1165 = vrot.lane.b32.xlu0 %v690, 32
        %v1166 = vpop.permute.xlu0 %1165
        %1167 = vrot.lane.b32.xlu0 %v691, 32
        %v1168 = vpop.permute.xlu0 %1167
        %1169 = vrot.lane.b32.xlu0 %v692, 32
        %v1170 = vpop.permute.xlu0 %1169
        %1171 = vrot.lane.b32.xlu0 %v693, 32
        %v1172 = vpop.permute.xlu0 %1171
        %1173 = vrot.lane.b32.xlu0 %v694, 32
        %v1174 = vpop.permute.xlu0 %1173
        %1175 = vrot.lane.b32.xlu0 %v695, 32
        %v1176 = vpop.permute.xlu0 %1175
        %1177 = vrot.lane.b32.xlu0 %v696, 32
        %v1178 = vpop.permute.xlu0 %1177
        %1179 = vrot.lane.b32.xlu0 %v697, 32
        %v1180 = vpop.permute.xlu0 %1179
        %1181 = vrot.lane.b32.xlu0 %v698, 32
        %v1182 = vpop.permute.xlu0 %1181
        %1183 = vrot.lane.b32.xlu0 %v699, 32
        %v1184 = vpop.permute.xlu0 %1183
        %1185 = vrot.lane.b32.xlu0 %v700, 32
        %v1186 = vpop.permute.xlu0 %1185
        %s1203 = scalar_lea.vmem %s310, 192 [#allocation10]
        %1204 = vst.msk [vmem:[%s1203] sm:$0xf] %vm765, %v1156
        %1205 = vst.msk [vmem:[%s1203 + $0x4] sm:$0xf] %vm765, %v1158
        %1206 = vst.msk [vmem:[%s1203 + $0x8] sm:$0xf] %vm765, %v1160
        %1207 = vst.msk [vmem:[%s1203 + $0xc] sm:$0xf] %vm765, %v1162
        %1208 = vst.msk [vmem:[%s1203 + $0x10] sm:$0xf] %vm765, %v1164
        %1209 = vst.msk [vmem:[%s1203 + $0x14] sm:$0xf] %vm765, %v1166
        %1210 = vst.msk [vmem:[%s1203 + $0x18] sm:$0xf] %vm765, %v1168
        %1211 = vst.msk [vmem:[%s1203 + $0x1c] sm:$0xf] %vm765, %v1170
        %1212 = vst.msk [vmem:[%s1203 + $0x20] sm:$0xf] %vm765, %v1172
        %1213 = vst.msk [vmem:[%s1203 + $0x24] sm:$0xf] %vm765, %v1174
        %1214 = vst.msk [vmem:[%s1203 + $0x28] sm:$0xf] %vm765, %v1176
        %1215 = vst.msk [vmem:[%s1203 + $0x2c] sm:$0xf] %vm765, %v1178
        %1216 = vst.msk [vmem:[%s1203 + $0x30] sm:$0xf] %vm765, %v1180
        %1217 = vst.msk [vmem:[%s1203 + $0x34] sm:$0xf] %vm765, %v1182
        %1218 = vst.msk [vmem:[%s1203 + $0x38] sm:$0xf] %vm765, %v1184
        %1219 = vst.msk [vmem:[%s1203 + $0x3c] sm:$0xf] %vm765, %v1186
        %s1220 = sand.u32 %s116, 1
        %s1221 = sand.u32 %s116, 1
        %s1222 = smul.addr %s1221, 256
        %s1223 = scalar_lea.vmem [#allocation8], %s1222
        %s1224 = sand.u32 %s144, 1
        %s1225 = scalar_lea.sflag [#allocation4], %s1224
        %s1226 = sand.u32 %s144, 1
        %s1227 = smul.addr %s1226, 64
        %s1228 = scalar_lea.vmem [#allocation9], %s1227
        %s1229 = sand.u32 %s172, 1
        %s1230 = sand.u32 %s172, 1
        %s1231 = smul.addr %s1230, 256
        %s1232 = scalar_lea.vmem [#allocation10], %s1231
        // Predicated region
        $region45: #{tpu_custom_call.1} parent=31 // pred_check
          %p1233 = pneg %p126
        $region46: #{tpu_custom_call.1} parent=31 // pred_check_branch
          %1235 = sbr.rel (%p1233) target = $region48
        $region47: #{tpu_custom_call.1} parent=31 // pred_region
          %s1236 = smul.u32 16, %s29
          %s1237 = smul.addr %s28, 128
          %s1238 = sadd.s32 %s1236, %s1237
          %s1239 = smul.addr %s1238, 4
          %s1240 = scalar_lea.vmem %s3, %s1239
          // Predicated region
          $region49: #{tpu_custom_call.1} parent=47 // pred_check
            _
          $region50: #{tpu_custom_call.1} parent=47 // pred_check_branch
            %1242 = sbr.rel (0) target = $region52
          $region51: #{tpu_custom_call.1} parent=47 // pred_region
            // Predicated region
            $region53: #{tpu_custom_call.1} parent=51 // pred_check
              _
            $region54: #{tpu_custom_call.1} parent=51 // pred_check_branch
              %1244 = sbr.rel target = $region56
            $region55: #{tpu_custom_call.1} parent=51 // pred_region
              // Predicated region
              $region68: #{tpu_custom_call.1} parent=55 // pred_check
                _
              $region69: #{tpu_custom_call.1} parent=55 // pred_check_branch
                %1386 = sbr.rel (0) target = $region71
              $region70: #{tpu_custom_call.1} parent=55 // pred_region
                loop: start=0, step=1, limit=1
                $region72: #{tpu_custom_call.1} parent=70 // loop_pre_header
                  _
                $region73: #{tpu_custom_call.1} parent=70 // loop_header
                  %s1388 = sphi 0, %s1392
                  %p1389 = scmp.ge.s32.totalorder %s1388, 1
                  %s1393 = sphi %s1223, %s1223
                  %s1394 = sphi %s1240, %s1240
                $region74: #{tpu_custom_call.1} parent=70 // loop_header_branch
                  %1391 = sbr.rel (%p1389) target = $region78
                $region75: #{tpu_custom_call.1} parent=70 // loop_body
                  _
                $region76: #{tpu_custom_call.1} parent=70 // loop_footer
                  %s1392 = sadd.s32 1, %s1388
                $region77: #{tpu_custom_call.1} parent=70 // loop_footer_branch
                  %1387 = sbr.rel target = $region73
                $region78: #{tpu_custom_call.1} parent=70 // loop_exit
                  _
                %s1396 = ssub.s32 16, 1
                loop: start=0, step=1, limit=1
                $region79: #{tpu_custom_call.1} parent=70 // loop_pre_header
                  _
                $region80: #{tpu_custom_call.1} parent=70 // loop_header
                  %s1398 = sphi 0, %s1402
                  %p1399 = scmp.ge.s32.totalorder %s1398, 1
                  %s1403 = sphi %s1223, %s1223
                  %s1404 = sphi %s1240, %s1240
                $region81: #{tpu_custom_call.1} parent=70 // loop_header_branch
                  %1401 = sbr.rel (%p1399) target = $region85
                $region82: #{tpu_custom_call.1} parent=70 // loop_body
                  %v1405 = vld [vmem:[%s1403] sm:%s1396]
                  %1406 = vst [vmem:[%s1404] sm:%s1396] %v1405
                  %v1407 = vld [vmem:[%s1403 + $0x4] sm:%s1396]
                  %1408 = vst [vmem:[%s1404 + $0x4] sm:%s1396] %v1407
                  %v1409 = vld [vmem:[%s1403 + $0x8] sm:%s1396]
                  %1410 = vst [vmem:[%s1404 + $0x8] sm:%s1396] %v1409
                  %v1411 = vld [vmem:[%s1403 + $0xc] sm:%s1396]
                  %1412 = vst [vmem:[%s1404 + $0xc] sm:%s1396] %v1411
                  %v1413 = vld [vmem:[%s1403 + $0x10] sm:%s1396]
                  %1414 = vst [vmem:[%s1404 + $0x10] sm:%s1396] %v1413
                  %v1415 = vld [vmem:[%s1403 + $0x14] sm:%s1396]
                  %1416 = vst [vmem:[%s1404 + $0x14] sm:%s1396] %v1415
                  %v1417 = vld [vmem:[%s1403 + $0x18] sm:%s1396]
                  %1418 = vst [vmem:[%s1404 + $0x18] sm:%s1396] %v1417
                  %v1419 = vld [vmem:[%s1403 + $0x1c] sm:%s1396]
                  %1420 = vst [vmem:[%s1404 + $0x1c] sm:%s1396] %v1419
                  %v1421 = vld [vmem:[%s1403 + $0x20] sm:%s1396]
                  %1422 = vst [vmem:[%s1404 + $0x20] sm:%s1396] %v1421
                  %v1423 = vld [vmem:[%s1403 + $0x24] sm:%s1396]
                  %1424 = vst [vmem:[%s1404 + $0x24] sm:%s1396] %v1423
                  %v1425 = vld [vmem:[%s1403 + $0x28] sm:%s1396]
                  %1426 = vst [vmem:[%s1404 + $0x28] sm:%s1396] %v1425
                  %v1427 = vld [vmem:[%s1403 + $0x2c] sm:%s1396]
                  %1428 = vst [vmem:[%s1404 + $0x2c] sm:%s1396] %v1427
                  %v1429 = vld [vmem:[%s1403 + $0x30] sm:%s1396]
                  %1430 = vst [vmem:[%s1404 + $0x30] sm:%s1396] %v1429
                  %v1431 = vld [vmem:[%s1403 + $0x34] sm:%s1396]
                  %1432 = vst [vmem:[%s1404 + $0x34] sm:%s1396] %v1431
                  %v1433 = vld [vmem:[%s1403 + $0x38] sm:%s1396]
                  %1434 = vst [vmem:[%s1404 + $0x38] sm:%s1396] %v1433
                  %v1435 = vld [vmem:[%s1403 + $0x3c] sm:%s1396]
                  %1436 = vst [vmem:[%s1404 + $0x3c] sm:%s1396] %v1435
                  %v1437 = vld [vmem:[%s1403 + $0x40] sm:%s1396]
                  %1438 = vst [vmem:[%s1404 + $0x80] sm:%s1396] %v1437
                  %v1439 = vld [vmem:[%s1403 + $0x44] sm:%s1396]
                  %1440 = vst [vmem:[%s1404 + $0x84] sm:%s1396] %v1439
                  %v1441 = vld [vmem:[%s1403 + $0x48] sm:%s1396]
                  %1442 = vst [vmem:[%s1404 + $0x88] sm:%s1396] %v1441
                  %v1443 = vld [vmem:[%s1403 + $0x4c] sm:%s1396]
                  %1444 = vst [vmem:[%s1404 + $0x8c] sm:%s1396] %v1443
                  %v1445 = vld [vmem:[%s1403 + $0x50] sm:%s1396]
                  %1446 = vst [vmem:[%s1404 + $0x90] sm:%s1396] %v1445
                  %v1447 = vld [vmem:[%s1403 + $0x54] sm:%s1396]
                  %1448 = vst [vmem:[%s1404 + $0x94] sm:%s1396] %v1447
                  %v1449 = vld [vmem:[%s1403 + $0x58] sm:%s1396]
                  %1450 = vst [vmem:[%s1404 + $0x98] sm:%s1396] %v1449
                  %v1451 = vld [vmem:[%s1403 + $0x5c] sm:%s1396]
                  %1452 = vst [vmem:[%s1404 + $0x9c] sm:%s1396] %v1451
                  %v1453 = vld [vmem:[%s1403 + $0x60] sm:%s1396]
                  %1454 = vst [vmem:[%s1404 + $0xa0] sm:%s1396] %v1453
                  %v1455 = vld [vmem:[%s1403 + $0x64] sm:%s1396]
                  %1456 = vst [vmem:[%s1404 + $0xa4] sm:%s1396] %v1455
                  %v1457 = vld [vmem:[%s1403 + $0x68] sm:%s1396]
                  %1458 = vst [vmem:[%s1404 + $0xa8] sm:%s1396] %v1457
                  %v1459 = vld [vmem:[%s1403 + $0x6c] sm:%s1396]
                  %1460 = vst [vmem:[%s1404 + $0xac] sm:%s1396] %v1459
                  %v1461 = vld [vmem:[%s1403 + $0x70] sm:%s1396]
                  %1462 = vst [vmem:[%s1404 + $0xb0] sm:%s1396] %v1461
                  %v1463 = vld [vmem:[%s1403 + $0x74] sm:%s1396]
                  %1464 = vst [vmem:[%s1404 + $0xb4] sm:%s1396] %v1463
                  %v1465 = vld [vmem:[%s1403 + $0x78] sm:%s1396]
                  %1466 = vst [vmem:[%s1404 + $0xb8] sm:%s1396] %v1465
                  %v1467 = vld [vmem:[%s1403 + $0x7c] sm:%s1396]
                  %1468 = vst [vmem:[%s1404 + $0xbc] sm:%s1396] %v1467
                  %v1469 = vld [vmem:[%s1403 + $0x80] sm:%s1396]
                  %1470 = vst [vmem:[%s1404 + $0x100] sm:%s1396] %v1469
                  %v1471 = vld [vmem:[%s1403 + $0x84] sm:%s1396]
                  %1472 = vst [vmem:[%s1404 + $0x104] sm:%s1396] %v1471
                  %v1473 = vld [vmem:[%s1403 + $0x88] sm:%s1396]
                  %1474 = vst [vmem:[%s1404 + $0x108] sm:%s1396] %v1473
                  %v1475 = vld [vmem:[%s1403 + $0x8c] sm:%s1396]
                  %1476 = vst [vmem:[%s1404 + $0x10c] sm:%s1396] %v1475
                  %v1477 = vld [vmem:[%s1403 + $0x90] sm:%s1396]
                  %1478 = vst [vmem:[%s1404 + $0x110] sm:%s1396] %v1477
                  %v1479 = vld [vmem:[%s1403 + $0x94] sm:%s1396]
                  %1480 = vst [vmem:[%s1404 + $0x114] sm:%s1396] %v1479
                  %v1481 = vld [vmem:[%s1403 + $0x98] sm:%s1396]
                  %1482 = vst [vmem:[%s1404 + $0x118] sm:%s1396] %v1481
                  %v1483 = vld [vmem:[%s1403 + $0x9c] sm:%s1396]
                  %1484 = vst [vmem:[%s1404 + $0x11c] sm:%s1396] %v1483
                  %v1485 = vld [vmem:[%s1403 + $0xa0] sm:%s1396]
                  %1486 = vst [vmem:[%s1404 + $0x120] sm:%s1396] %v1485
                  %v1487 = vld [vmem:[%s1403 + $0xa4] sm:%s1396]
                  %1488 = vst [vmem:[%s1404 + $0x124] sm:%s1396] %v1487
                  %v1489 = vld [vmem:[%s1403 + $0xa8] sm:%s1396]
                  %1490 = vst [vmem:[%s1404 + $0x128] sm:%s1396] %v1489
                  %v1491 = vld [vmem:[%s1403 + $0xac] sm:%s1396]
                  %1492 = vst [vmem:[%s1404 + $0x12c] sm:%s1396] %v1491
                  %v1493 = vld [vmem:[%s1403 + $0xb0] sm:%s1396]
                  %1494 = vst [vmem:[%s1404 + $0x130] sm:%s1396] %v1493
                  %v1495 = vld [vmem:[%s1403 + $0xb4] sm:%s1396]
                  %1496 = vst [vmem:[%s1404 + $0x134] sm:%s1396] %v1495
                  %v1497 = vld [vmem:[%s1403 + $0xb8] sm:%s1396]
                  %1498 = vst [vmem:[%s1404 + $0x138] sm:%s1396] %v1497
                  %v1499 = vld [vmem:[%s1403 + $0xbc] sm:%s1396]
                  %1500 = vst [vmem:[%s1404 + $0x13c] sm:%s1396] %v1499
                  %v1501 = vld [vmem:[%s1403 + $0xc0] sm:%s1396]
                  %1502 = vst [vmem:[%s1404 + $0x180] sm:%s1396] %v1501
                  %v1503 = vld [vmem:[%s1403 + $0xc4] sm:%s1396]
                  %1504 = vst [vmem:[%s1404 + $0x184] sm:%s1396] %v1503
                  %v1505 = vld [vmem:[%s1403 + $0xc8] sm:%s1396]
                  %1506 = vst [vmem:[%s1404 + $0x188] sm:%s1396] %v1505
                  %v1507 = vld [vmem:[%s1403 + $0xcc] sm:%s1396]
                  %1508 = vst [vmem:[%s1404 + $0x18c] sm:%s1396] %v1507
                  %v1509 = vld [vmem:[%s1403 + $0xd0] sm:%s1396]
                  %1510 = vst [vmem:[%s1404 + $0x190] sm:%s1396] %v1509
                  %v1511 = vld [vmem:[%s1403 + $0xd4] sm:%s1396]
                  %1512 = vst [vmem:[%s1404 + $0x194] sm:%s1396] %v1511
                  %v1513 = vld [vmem:[%s1403 + $0xd8] sm:%s1396]
                  %1514 = vst [vmem:[%s1404 + $0x198] sm:%s1396] %v1513
                  %v1515 = vld [vmem:[%s1403 + $0xdc] sm:%s1396]
                  %1516 = vst [vmem:[%s1404 + $0x19c] sm:%s1396] %v1515
                  %v1517 = vld [vmem:[%s1403 + $0xe0] sm:%s1396]
                  %1518 = vst [vmem:[%s1404 + $0x1a0] sm:%s1396] %v1517
                  %v1519 = vld [vmem:[%s1403 + $0xe4] sm:%s1396]
                  %1520 = vst [vmem:[%s1404 + $0x1a4] sm:%s1396] %v1519
                  %v1521 = vld [vmem:[%s1403 + $0xe8] sm:%s1396]
                  %1522 = vst [vmem:[%s1404 + $0x1a8] sm:%s1396] %v1521
                  %v1523 = vld [vmem:[%s1403 + $0xec] sm:%s1396]
                  %1524 = vst [vmem:[%s1404 + $0x1ac] sm:%s1396] %v1523
                  %v1525 = vld [vmem:[%s1403 + $0xf0] sm:%s1396]
                  %1526 = vst [vmem:[%s1404 + $0x1b0] sm:%s1396] %v1525
                  %v1527 = vld [vmem:[%s1403 + $0xf4] sm:%s1396]
                  %1528 = vst [vmem:[%s1404 + $0x1b4] sm:%s1396] %v1527
                  %v1529 = vld [vmem:[%s1403 + $0xf8] sm:%s1396]
                  %1530 = vst [vmem:[%s1404 + $0x1b8] sm:%s1396] %v1529
                  %v1531 = vld [vmem:[%s1403 + $0xfc] sm:%s1396]
                  %1532 = vst [vmem:[%s1404 + $0x1bc] sm:%s1396] %v1531
                $region83: #{tpu_custom_call.1} parent=70 // loop_footer
                  %s1402 = sadd.s32 1, %s1398
                $region84: #{tpu_custom_call.1} parent=70 // loop_footer_branch
                  %1397 = sbr.rel target = $region80
                $region85: #{tpu_custom_call.1} parent=70 // loop_exit
                  _
              $region71: #{tpu_custom_call.1} parent=55 // pred_fallthru
                _
            $region56: #{tpu_custom_call.1} parent=51 // pred_fallthru
              _
            // Predicated region
            $region57: #{tpu_custom_call.1} parent=51 // pred_check
              _
            $region58: #{tpu_custom_call.1} parent=51 // pred_check_branch
              %1246 = sbr.rel (0) target = $region60
            $region59: #{tpu_custom_call.1} parent=51 // pred_region
              %s1248 = ssub.s32 16, 1
              loop: start=0, step=1, limit=1
              $region61: #{tpu_custom_call.1} parent=59 // loop_pre_header
                _
              $region62: #{tpu_custom_call.1} parent=59 // loop_header
                %s1250 = sphi 0, %s1254
                %p1251 = scmp.ge.s32.totalorder %s1250, 1
                %s1255 = sphi %s1223, %s1223
                %s1256 = sphi %s1240, %s1240
              $region63: #{tpu_custom_call.1} parent=59 // loop_header_branch
                %1253 = sbr.rel (%p1251) target = $region67
              $region64: #{tpu_custom_call.1} parent=59 // loop_body
                %v1257 = vld [vmem:[%s1255] sm:%s1248]
                %1258 = vst [vmem:[%s1256] sm:%s1248] %v1257
                %v1259 = vld [vmem:[%s1255 + $0x4] sm:%s1248]
                %1260 = vst [vmem:[%s1256 + $0x4] sm:%s1248] %v1259
                %v1261 = vld [vmem:[%s1255 + $0x8] sm:%s1248]
                %1262 = vst [vmem:[%s1256 + $0x8] sm:%s1248] %v1261
                %v1263 = vld [vmem:[%s1255 + $0xc] sm:%s1248]
                %1264 = vst [vmem:[%s1256 + $0xc] sm:%s1248] %v1263
                %v1265 = vld [vmem:[%s1255 + $0x10] sm:%s1248]
                %1266 = vst [vmem:[%s1256 + $0x10] sm:%s1248] %v1265
                %v1267 = vld [vmem:[%s1255 + $0x14] sm:%s1248]
                %1268 = vst [vmem:[%s1256 + $0x14] sm:%s1248] %v1267
                %v1269 = vld [vmem:[%s1255 + $0x18] sm:%s1248]
                %1270 = vst [vmem:[%s1256 + $0x18] sm:%s1248] %v1269
                %v1271 = vld [vmem:[%s1255 + $0x1c] sm:%s1248]
                %1272 = vst [vmem:[%s1256 + $0x1c] sm:%s1248] %v1271
                %v1273 = vld [vmem:[%s1255 + $0x20] sm:%s1248]
                %1274 = vst [vmem:[%s1256 + $0x20] sm:%s1248] %v1273
                %v1275 = vld [vmem:[%s1255 + $0x24] sm:%s1248]
                %1276 = vst [vmem:[%s1256 + $0x24] sm:%s1248] %v1275
                %v1277 = vld [vmem:[%s1255 + $0x28] sm:%s1248]
                %1278 = vst [vmem:[%s1256 + $0x28] sm:%s1248] %v1277
                %v1279 = vld [vmem:[%s1255 + $0x2c] sm:%s1248]
                %1280 = vst [vmem:[%s1256 + $0x2c] sm:%s1248] %v1279
                %v1281 = vld [vmem:[%s1255 + $0x30] sm:%s1248]
                %1282 = vst [vmem:[%s1256 + $0x30] sm:%s1248] %v1281
                %v1283 = vld [vmem:[%s1255 + $0x34] sm:%s1248]
                %1284 = vst [vmem:[%s1256 + $0x34] sm:%s1248] %v1283
                %v1285 = vld [vmem:[%s1255 + $0x38] sm:%s1248]
                %1286 = vst [vmem:[%s1256 + $0x38] sm:%s1248] %v1285
                %v1287 = vld [vmem:[%s1255 + $0x3c] sm:%s1248]
                %1288 = vst [vmem:[%s1256 + $0x3c] sm:%s1248] %v1287
                %v1289 = vld [vmem:[%s1255 + $0x40] sm:%s1248]
                %1290 = vst [vmem:[%s1256 + $0x80] sm:%s1248] %v1289
                %v1291 = vld [vmem:[%s1255 + $0x44] sm:%s1248]
                %1292 = vst [vmem:[%s1256 + $0x84] sm:%s1248] %v1291
                %v1293 = vld [vmem:[%s1255 + $0x48] sm:%s1248]
                %1294 = vst [vmem:[%s1256 + $0x88] sm:%s1248] %v1293
                %v1295 = vld [vmem:[%s1255 + $0x4c] sm:%s1248]
                %1296 = vst [vmem:[%s1256 + $0x8c] sm:%s1248] %v1295
                %v1297 = vld [vmem:[%s1255 + $0x50] sm:%s1248]
                %1298 = vst [vmem:[%s1256 + $0x90] sm:%s1248] %v1297
                %v1299 = vld [vmem:[%s1255 + $0x54] sm:%s1248]
                %1300 = vst [vmem:[%s1256 + $0x94] sm:%s1248] %v1299
                %v1301 = vld [vmem:[%s1255 + $0x58] sm:%s1248]
                %1302 = vst [vmem:[%s1256 + $0x98] sm:%s1248] %v1301
                %v1303 = vld [vmem:[%s1255 + $0x5c] sm:%s1248]
                %1304 = vst [vmem:[%s1256 + $0x9c] sm:%s1248] %v1303
                %v1305 = vld [vmem:[%s1255 + $0x60] sm:%s1248]
                %1306 = vst [vmem:[%s1256 + $0xa0] sm:%s1248] %v1305
                %v1307 = vld [vmem:[%s1255 + $0x64] sm:%s1248]
                %1308 = vst [vmem:[%s1256 + $0xa4] sm:%s1248] %v1307
                %v1309 = vld [vmem:[%s1255 + $0x68] sm:%s1248]
                %1310 = vst [vmem:[%s1256 + $0xa8] sm:%s1248] %v1309
                %v1311 = vld [vmem:[%s1255 + $0x6c] sm:%s1248]
                %1312 = vst [vmem:[%s1256 + $0xac] sm:%s1248] %v1311
                %v1313 = vld [vmem:[%s1255 + $0x70] sm:%s1248]
                %1314 = vst [vmem:[%s1256 + $0xb0] sm:%s1248] %v1313
                %v1315 = vld [vmem:[%s1255 + $0x74] sm:%s1248]
                %1316 = vst [vmem:[%s1256 + $0xb4] sm:%s1248] %v1315
                %v1317 = vld [vmem:[%s1255 + $0x78] sm:%s1248]
                %1318 = vst [vmem:[%s1256 + $0xb8] sm:%s1248] %v1317
                %v1319 = vld [vmem:[%s1255 + $0x7c] sm:%s1248]
                %1320 = vst [vmem:[%s1256 + $0xbc] sm:%s1248] %v1319
                %v1321 = vld [vmem:[%s1255 + $0x80] sm:%s1248]
                %1322 = vst [vmem:[%s1256 + $0x100] sm:%s1248] %v1321
                %v1323 = vld [vmem:[%s1255 + $0x84] sm:%s1248]
                %1324 = vst [vmem:[%s1256 + $0x104] sm:%s1248] %v1323
                %v1325 = vld [vmem:[%s1255 + $0x88] sm:%s1248]
                %1326 = vst [vmem:[%s1256 + $0x108] sm:%s1248] %v1325
                %v1327 = vld [vmem:[%s1255 + $0x8c] sm:%s1248]
                %1328 = vst [vmem:[%s1256 + $0x10c] sm:%s1248] %v1327
                %v1329 = vld [vmem:[%s1255 + $0x90] sm:%s1248]
                %1330 = vst [vmem:[%s1256 + $0x110] sm:%s1248] %v1329
                %v1331 = vld [vmem:[%s1255 + $0x94] sm:%s1248]
                %1332 = vst [vmem:[%s1256 + $0x114] sm:%s1248] %v1331
                %v1333 = vld [vmem:[%s1255 + $0x98] sm:%s1248]
                %1334 = vst [vmem:[%s1256 + $0x118] sm:%s1248] %v1333
                %v1335 = vld [vmem:[%s1255 + $0x9c] sm:%s1248]
                %1336 = vst [vmem:[%s1256 + $0x11c] sm:%s1248] %v1335
                %v1337 = vld [vmem:[%s1255 + $0xa0] sm:%s1248]
                %1338 = vst [vmem:[%s1256 + $0x120] sm:%s1248] %v1337
                %v1339 = vld [vmem:[%s1255 + $0xa4] sm:%s1248]
                %1340 = vst [vmem:[%s1256 + $0x124] sm:%s1248] %v1339
                %v1341 = vld [vmem:[%s1255 + $0xa8] sm:%s1248]
                %1342 = vst [vmem:[%s1256 + $0x128] sm:%s1248] %v1341
                %v1343 = vld [vmem:[%s1255 + $0xac] sm:%s1248]
                %1344 = vst [vmem:[%s1256 + $0x12c] sm:%s1248] %v1343
                %v1345 = vld [vmem:[%s1255 + $0xb0] sm:%s1248]
                %1346 = vst [vmem:[%s1256 + $0x130] sm:%s1248] %v1345
                %v1347 = vld [vmem:[%s1255 + $0xb4] sm:%s1248]
                %1348 = vst [vmem:[%s1256 + $0x134] sm:%s1248] %v1347
                %v1349 = vld [vmem:[%s1255 + $0xb8] sm:%s1248]
                %1350 = vst [vmem:[%s1256 + $0x138] sm:%s1248] %v1349
                %v1351 = vld [vmem:[%s1255 + $0xbc] sm:%s1248]
                %1352 = vst [vmem:[%s1256 + $0x13c] sm:%s1248] %v1351
                %v1353 = vld [vmem:[%s1255 + $0xc0] sm:%s1248]
                %1354 = vst [vmem:[%s1256 + $0x180] sm:%s1248] %v1353
                %v1355 = vld [vmem:[%s1255 + $0xc4] sm:%s1248]
                %1356 = vst [vmem:[%s1256 + $0x184] sm:%s1248] %v1355
                %v1357 = vld [vmem:[%s1255 + $0xc8] sm:%s1248]
                %1358 = vst [vmem:[%s1256 + $0x188] sm:%s1248] %v1357
                %v1359 = vld [vmem:[%s1255 + $0xcc] sm:%s1248]
                %1360 = vst [vmem:[%s1256 + $0x18c] sm:%s1248] %v1359
                %v1361 = vld [vmem:[%s1255 + $0xd0] sm:%s1248]
                %1362 = vst [vmem:[%s1256 + $0x190] sm:%s1248] %v1361
                %v1363 = vld [vmem:[%s1255 + $0xd4] sm:%s1248]
                %1364 = vst [vmem:[%s1256 + $0x194] sm:%s1248] %v1363
                %v1365 = vld [vmem:[%s1255 + $0xd8] sm:%s1248]
                %1366 = vst [vmem:[%s1256 + $0x198] sm:%s1248] %v1365
                %v1367 = vld [vmem:[%s1255 + $0xdc] sm:%s1248]
                %1368 = vst [vmem:[%s1256 + $0x19c] sm:%s1248] %v1367
                %v1369 = vld [vmem:[%s1255 + $0xe0] sm:%s1248]
                %1370 = vst [vmem:[%s1256 + $0x1a0] sm:%s1248] %v1369
                %v1371 = vld [vmem:[%s1255 + $0xe4] sm:%s1248]
                %1372 = vst [vmem:[%s1256 + $0x1a4] sm:%s1248] %v1371
                %v1373 = vld [vmem:[%s1255 + $0xe8] sm:%s1248]
                %1374 = vst [vmem:[%s1256 + $0x1a8] sm:%s1248] %v1373
                %v1375 = vld [vmem:[%s1255 + $0xec] sm:%s1248]
                %1376 = vst [vmem:[%s1256 + $0x1ac] sm:%s1248] %v1375
                %v1377 = vld [vmem:[%s1255 + $0xf0] sm:%s1248]
                %1378 = vst [vmem:[%s1256 + $0x1b0] sm:%s1248] %v1377
                %v1379 = vld [vmem:[%s1255 + $0xf4] sm:%s1248]
                %1380 = vst [vmem:[%s1256 + $0x1b4] sm:%s1248] %v1379
                %v1381 = vld [vmem:[%s1255 + $0xf8] sm:%s1248]
                %1382 = vst [vmem:[%s1256 + $0x1b8] sm:%s1248] %v1381
                %v1383 = vld [vmem:[%s1255 + $0xfc] sm:%s1248]
                %1384 = vst [vmem:[%s1256 + $0x1bc] sm:%s1248] %v1383
              $region65: #{tpu_custom_call.1} parent=59 // loop_footer
                %s1254 = sadd.s32 1, %s1250
              $region66: #{tpu_custom_call.1} parent=59 // loop_footer_branch
                %1249 = sbr.rel target = $region62
              $region67: #{tpu_custom_call.1} parent=59 // loop_exit
                _
            $region60: #{tpu_custom_call.1} parent=51 // pred_fallthru
              _
          $region52: #{tpu_custom_call.1} parent=47 // pred_fallthru
            _
          %1533 = vnop
        $region48: #{tpu_custom_call.1} parent=31 // pred_fallthru
          _
        // Predicated region
        $region86: #{tpu_custom_call.1} parent=31 // pred_check
          %p1534 = pneg %p154
        $region87: #{tpu_custom_call.1} parent=31 // pred_check_branch
          %1536 = sbr.rel (%p1534) target = $region89
        $region88: #{tpu_custom_call.1} parent=31 // pred_region
          %1538 = vsyncadd %s1225, 0
          %s1539 = smul.addr %s28, 32
          %s1540 = sadd.s32 %s29, %s1539
          %s1541 = smul.addr %s1540, 4
          %s1542 = scalar_lea.hbm %s4, %s1541
          %s1543 = sshll.u32 %s1228, 4
          %s1544 = int_to_ptr.vmem [resolvable:$true] %s1543
          %s1545 = sshll.u32 %s1542, 4
          %s1546 = int_to_ptr.hbm [resolvable:$true] %s1545
          %1551 = dma.vmem_to_hbm [thread:$0]  %s1544, 1024, %s1546, %s1225, 64, 128, 4
        $region89: #{tpu_custom_call.1} parent=31 // pred_fallthru
          _
        // Predicated region
        $region90: #{tpu_custom_call.1} parent=31 // pred_check
          %p1552 = pneg %p182
        $region91: #{tpu_custom_call.1} parent=31 // pred_check_branch
          %1554 = sbr.rel (%p1552) target = $region93
        $region92: #{tpu_custom_call.1} parent=31 // pred_region
          %s1555 = smul.u32 16, %s29
          %s1556 = smul.addr %s28, 128
          %s1557 = sadd.s32 %s1555, %s1556
          %s1558 = smul.addr %s1557, 4
          %s1559 = scalar_lea.vmem %s5, %s1558
          // Predicated region
          $region94: #{tpu_custom_call.1} parent=92 // pred_check
            _
          $region95: #{tpu_custom_call.1} parent=92 // pred_check_branch
            %1561 = sbr.rel (0) target = $region97
          $region96: #{tpu_custom_call.1} parent=92 // pred_region
            // Predicated region
            $region98: #{tpu_custom_call.1} parent=96 // pred_check
              _
            $region99: #{tpu_custom_call.1} parent=96 // pred_check_branch
              %1563 = sbr.rel target = $region101
            $region100: #{tpu_custom_call.1} parent=96 // pred_region
              // Predicated region
              $region113: #{tpu_custom_call.1} parent=100 // pred_check
                _
              $region114: #{tpu_custom_call.1} parent=100 // pred_check_branch
                %1705 = sbr.rel (0) target = $region116
              $region115: #{tpu_custom_call.1} parent=100 // pred_region
                loop: start=0, step=1, limit=1
                $region117: #{tpu_custom_call.1} parent=115 // loop_pre_header
                  _
                $region118: #{tpu_custom_call.1} parent=115 // loop_header
                  %s1707 = sphi 0, %s1711
                  %p1708 = scmp.ge.s32.totalorder %s1707, 1
                  %s1712 = sphi %s1232, %s1232
                  %s1713 = sphi %s1559, %s1559
                $region119: #{tpu_custom_call.1} parent=115 // loop_header_branch
                  %1710 = sbr.rel (%p1708) target = $region123
                $region120: #{tpu_custom_call.1} parent=115 // loop_body
                  _
                $region121: #{tpu_custom_call.1} parent=115 // loop_footer
                  %s1711 = sadd.s32 1, %s1707
                $region122: #{tpu_custom_call.1} parent=115 // loop_footer_branch
                  %1706 = sbr.rel target = $region118
                $region123: #{tpu_custom_call.1} parent=115 // loop_exit
                  _
                %s1715 = ssub.s32 16, 1
                loop: start=0, step=1, limit=1
                $region124: #{tpu_custom_call.1} parent=115 // loop_pre_header
                  _
                $region125: #{tpu_custom_call.1} parent=115 // loop_header
                  %s1717 = sphi 0, %s1721
                  %p1718 = scmp.ge.s32.totalorder %s1717, 1
                  %s1722 = sphi %s1232, %s1232
                  %s1723 = sphi %s1559, %s1559
                $region126: #{tpu_custom_call.1} parent=115 // loop_header_branch
                  %1720 = sbr.rel (%p1718) target = $region130
                $region127: #{tpu_custom_call.1} parent=115 // loop_body
                  %v1724 = vld [vmem:[%s1722] sm:%s1715]
                  %1725 = vst [vmem:[%s1723] sm:%s1715] %v1724
                  %v1726 = vld [vmem:[%s1722 + $0x4] sm:%s1715]
                  %1727 = vst [vmem:[%s1723 + $0x4] sm:%s1715] %v1726
                  %v1728 = vld [vmem:[%s1722 + $0x8] sm:%s1715]
                  %1729 = vst [vmem:[%s1723 + $0x8] sm:%s1715] %v1728
                  %v1730 = vld [vmem:[%s1722 + $0xc] sm:%s1715]
                  %1731 = vst [vmem:[%s1723 + $0xc] sm:%s1715] %v1730
                  %v1732 = vld [vmem:[%s1722 + $0x10] sm:%s1715]
                  %1733 = vst [vmem:[%s1723 + $0x10] sm:%s1715] %v1732
                  %v1734 = vld [vmem:[%s1722 + $0x14] sm:%s1715]
                  %1735 = vst [vmem:[%s1723 + $0x14] sm:%s1715] %v1734
                  %v1736 = vld [vmem:[%s1722 + $0x18] sm:%s1715]
                  %1737 = vst [vmem:[%s1723 + $0x18] sm:%s1715] %v1736
                  %v1738 = vld [vmem:[%s1722 + $0x1c] sm:%s1715]
                  %1739 = vst [vmem:[%s1723 + $0x1c] sm:%s1715] %v1738
                  %v1740 = vld [vmem:[%s1722 + $0x20] sm:%s1715]
                  %1741 = vst [vmem:[%s1723 + $0x20] sm:%s1715] %v1740
                  %v1742 = vld [vmem:[%s1722 + $0x24] sm:%s1715]
                  %1743 = vst [vmem:[%s1723 + $0x24] sm:%s1715] %v1742
                  %v1744 = vld [vmem:[%s1722 + $0x28] sm:%s1715]
                  %1745 = vst [vmem:[%s1723 + $0x28] sm:%s1715] %v1744
                  %v1746 = vld [vmem:[%s1722 + $0x2c] sm:%s1715]
                  %1747 = vst [vmem:[%s1723 + $0x2c] sm:%s1715] %v1746
                  %v1748 = vld [vmem:[%s1722 + $0x30] sm:%s1715]
                  %1749 = vst [vmem:[%s1723 + $0x30] sm:%s1715] %v1748
                  %v1750 = vld [vmem:[%s1722 + $0x34] sm:%s1715]
                  %1751 = vst [vmem:[%s1723 + $0x34] sm:%s1715] %v1750
                  %v1752 = vld [vmem:[%s1722 + $0x38] sm:%s1715]
                  %1753 = vst [vmem:[%s1723 + $0x38] sm:%s1715] %v1752
                  %v1754 = vld [vmem:[%s1722 + $0x3c] sm:%s1715]
                  %1755 = vst [vmem:[%s1723 + $0x3c] sm:%s1715] %v1754
                  %v1756 = vld [vmem:[%s1722 + $0x40] sm:%s1715]
                  %1757 = vst [vmem:[%s1723 + $0x80] sm:%s1715] %v1756
                  %v1758 = vld [vmem:[%s1722 + $0x44] sm:%s1715]
                  %1759 = vst [vmem:[%s1723 + $0x84] sm:%s1715] %v1758
                  %v1760 = vld [vmem:[%s1722 + $0x48] sm:%s1715]
                  %1761 = vst [vmem:[%s1723 + $0x88] sm:%s1715] %v1760
                  %v1762 = vld [vmem:[%s1722 + $0x4c] sm:%s1715]
                  %1763 = vst [vmem:[%s1723 + $0x8c] sm:%s1715] %v1762
                  %v1764 = vld [vmem:[%s1722 + $0x50] sm:%s1715]
                  %1765 = vst [vmem:[%s1723 + $0x90] sm:%s1715] %v1764
                  %v1766 = vld [vmem:[%s1722 + $0x54] sm:%s1715]
                  %1767 = vst [vmem:[%s1723 + $0x94] sm:%s1715] %v1766
                  %v1768 = vld [vmem:[%s1722 + $0x58] sm:%s1715]
                  %1769 = vst [vmem:[%s1723 + $0x98] sm:%s1715] %v1768
                  %v1770 = vld [vmem:[%s1722 + $0x5c] sm:%s1715]
                  %1771 = vst [vmem:[%s1723 + $0x9c] sm:%s1715] %v1770
                  %v1772 = vld [vmem:[%s1722 + $0x60] sm:%s1715]
                  %1773 = vst [vmem:[%s1723 + $0xa0] sm:%s1715] %v1772
                  %v1774 = vld [vmem:[%s1722 + $0x64] sm:%s1715]
                  %1775 = vst [vmem:[%s1723 + $0xa4] sm:%s1715] %v1774
                  %v1776 = vld [vmem:[%s1722 + $0x68] sm:%s1715]
                  %1777 = vst [vmem:[%s1723 + $0xa8] sm:%s1715] %v1776
                  %v1778 = vld [vmem:[%s1722 + $0x6c] sm:%s1715]
                  %1779 = vst [vmem:[%s1723 + $0xac] sm:%s1715] %v1778
                  %v1780 = vld [vmem:[%s1722 + $0x70] sm:%s1715]
                  %1781 = vst [vmem:[%s1723 + $0xb0] sm:%s1715] %v1780
                  %v1782 = vld [vmem:[%s1722 + $0x74] sm:%s1715]
                  %1783 = vst [vmem:[%s1723 + $0xb4] sm:%s1715] %v1782
                  %v1784 = vld [vmem:[%s1722 + $0x78] sm:%s1715]
                  %1785 = vst [vmem:[%s1723 + $0xb8] sm:%s1715] %v1784
                  %v1786 = vld [vmem:[%s1722 + $0x7c] sm:%s1715]
                  %1787 = vst [vmem:[%s1723 + $0xbc] sm:%s1715] %v1786
                  %v1788 = vld [vmem:[%s1722 + $0x80] sm:%s1715]
                  %1789 = vst [vmem:[%s1723 + $0x100] sm:%s1715] %v1788
                  %v1790 = vld [vmem:[%s1722 + $0x84] sm:%s1715]
                  %1791 = vst [vmem:[%s1723 + $0x104] sm:%s1715] %v1790
                  %v1792 = vld [vmem:[%s1722 + $0x88] sm:%s1715]
                  %1793 = vst [vmem:[%s1723 + $0x108] sm:%s1715] %v1792
                  %v1794 = vld [vmem:[%s1722 + $0x8c] sm:%s1715]
                  %1795 = vst [vmem:[%s1723 + $0x10c] sm:%s1715] %v1794
                  %v1796 = vld [vmem:[%s1722 + $0x90] sm:%s1715]
                  %1797 = vst [vmem:[%s1723 + $0x110] sm:%s1715] %v1796
                  %v1798 = vld [vmem:[%s1722 + $0x94] sm:%s1715]
                  %1799 = vst [vmem:[%s1723 + $0x114] sm:%s1715] %v1798
                  %v1800 = vld [vmem:[%s1722 + $0x98] sm:%s1715]
                  %1801 = vst [vmem:[%s1723 + $0x118] sm:%s1715] %v1800
                  %v1802 = vld [vmem:[%s1722 + $0x9c] sm:%s1715]
                  %1803 = vst [vmem:[%s1723 + $0x11c] sm:%s1715] %v1802
                  %v1804 = vld [vmem:[%s1722 + $0xa0] sm:%s1715]
                  %1805 = vst [vmem:[%s1723 + $0x120] sm:%s1715] %v1804
                  %v1806 = vld [vmem:[%s1722 + $0xa4] sm:%s1715]
                  %1807 = vst [vmem:[%s1723 + $0x124] sm:%s1715] %v1806
                  %v1808 = vld [vmem:[%s1722 + $0xa8] sm:%s1715]
                  %1809 = vst [vmem:[%s1723 + $0x128] sm:%s1715] %v1808
                  %v1810 = vld [vmem:[%s1722 + $0xac] sm:%s1715]
                  %1811 = vst [vmem:[%s1723 + $0x12c] sm:%s1715] %v1810
                  %v1812 = vld [vmem:[%s1722 + $0xb0] sm:%s1715]
                  %1813 = vst [vmem:[%s1723 + $0x130] sm:%s1715] %v1812
                  %v1814 = vld [vmem:[%s1722 + $0xb4] sm:%s1715]
                  %1815 = vst [vmem:[%s1723 + $0x134] sm:%s1715] %v1814
                  %v1816 = vld [vmem:[%s1722 + $0xb8] sm:%s1715]
                  %1817 = vst [vmem:[%s1723 + $0x138] sm:%s1715] %v1816
                  %v1818 = vld [vmem:[%s1722 + $0xbc] sm:%s1715]
                  %1819 = vst [vmem:[%s1723 + $0x13c] sm:%s1715] %v1818
                  %v1820 = vld [vmem:[%s1722 + $0xc0] sm:%s1715]
                  %1821 = vst [vmem:[%s1723 + $0x180] sm:%s1715] %v1820
                  %v1822 = vld [vmem:[%s1722 + $0xc4] sm:%s1715]
                  %1823 = vst [vmem:[%s1723 + $0x184] sm:%s1715] %v1822
                  %v1824 = vld [vmem:[%s1722 + $0xc8] sm:%s1715]
                  %1825 = vst [vmem:[%s1723 + $0x188] sm:%s1715] %v1824
                  %v1826 = vld [vmem:[%s1722 + $0xcc] sm:%s1715]
                  %1827 = vst [vmem:[%s1723 + $0x18c] sm:%s1715] %v1826
                  %v1828 = vld [vmem:[%s1722 + $0xd0] sm:%s1715]
                  %1829 = vst [vmem:[%s1723 + $0x190] sm:%s1715] %v1828
                  %v1830 = vld [vmem:[%s1722 + $0xd4] sm:%s1715]
                  %1831 = vst [vmem:[%s1723 + $0x194] sm:%s1715] %v1830
                  %v1832 = vld [vmem:[%s1722 + $0xd8] sm:%s1715]
                  %1833 = vst [vmem:[%s1723 + $0x198] sm:%s1715] %v1832
                  %v1834 = vld [vmem:[%s1722 + $0xdc] sm:%s1715]
                  %1835 = vst [vmem:[%s1723 + $0x19c] sm:%s1715] %v1834
                  %v1836 = vld [vmem:[%s1722 + $0xe0] sm:%s1715]
                  %1837 = vst [vmem:[%s1723 + $0x1a0] sm:%s1715] %v1836
                  %v1838 = vld [vmem:[%s1722 + $0xe4] sm:%s1715]
                  %1839 = vst [vmem:[%s1723 + $0x1a4] sm:%s1715] %v1838
                  %v1840 = vld [vmem:[%s1722 + $0xe8] sm:%s1715]
                  %1841 = vst [vmem:[%s1723 + $0x1a8] sm:%s1715] %v1840
                  %v1842 = vld [vmem:[%s1722 + $0xec] sm:%s1715]
                  %1843 = vst [vmem:[%s1723 + $0x1ac] sm:%s1715] %v1842
                  %v1844 = vld [vmem:[%s1722 + $0xf0] sm:%s1715]
                  %1845 = vst [vmem:[%s1723 + $0x1b0] sm:%s1715] %v1844
                  %v1846 = vld [vmem:[%s1722 + $0xf4] sm:%s1715]
                  %1847 = vst [vmem:[%s1723 + $0x1b4] sm:%s1715] %v1846
                  %v1848 = vld [vmem:[%s1722 + $0xf8] sm:%s1715]
                  %1849 = vst [vmem:[%s1723 + $0x1b8] sm:%s1715] %v1848
                  %v1850 = vld [vmem:[%s1722 + $0xfc] sm:%s1715]
                  %1851 = vst [vmem:[%s1723 + $0x1bc] sm:%s1715] %v1850
                $region128: #{tpu_custom_call.1} parent=115 // loop_footer
                  %s1721 = sadd.s32 1, %s1717
                $region129: #{tpu_custom_call.1} parent=115 // loop_footer_branch
                  %1716 = sbr.rel target = $region125
                $region130: #{tpu_custom_call.1} parent=115 // loop_exit
                  _
              $region116: #{tpu_custom_call.1} parent=100 // pred_fallthru
                _
            $region101: #{tpu_custom_call.1} parent=96 // pred_fallthru
              _
            // Predicated region
            $region102: #{tpu_custom_call.1} parent=96 // pred_check
              _
            $region103: #{tpu_custom_call.1} parent=96 // pred_check_branch
              %1565 = sbr.rel (0) target = $region105
            $region104: #{tpu_custom_call.1} parent=96 // pred_region
              %s1567 = ssub.s32 16, 1
              loop: start=0, step=1, limit=1
              $region106: #{tpu_custom_call.1} parent=104 // loop_pre_header
                _
              $region107: #{tpu_custom_call.1} parent=104 // loop_header
                %s1569 = sphi 0, %s1573
                %p1570 = scmp.ge.s32.totalorder %s1569, 1
                %s1574 = sphi %s1232, %s1232
                %s1575 = sphi %s1559, %s1559
              $region108: #{tpu_custom_call.1} parent=104 // loop_header_branch
                %1572 = sbr.rel (%p1570) target = $region112
              $region109: #{tpu_custom_call.1} parent=104 // loop_body
                %v1576 = vld [vmem:[%s1574] sm:%s1567]
                %1577 = vst [vmem:[%s1575] sm:%s1567] %v1576
                %v1578 = vld [vmem:[%s1574 + $0x4] sm:%s1567]
                %1579 = vst [vmem:[%s1575 + $0x4] sm:%s1567] %v1578
                %v1580 = vld [vmem:[%s1574 + $0x8] sm:%s1567]
                %1581 = vst [vmem:[%s1575 + $0x8] sm:%s1567] %v1580
                %v1582 = vld [vmem:[%s1574 + $0xc] sm:%s1567]
                %1583 = vst [vmem:[%s1575 + $0xc] sm:%s1567] %v1582
                %v1584 = vld [vmem:[%s1574 + $0x10] sm:%s1567]
                %1585 = vst [vmem:[%s1575 + $0x10] sm:%s1567] %v1584
                %v1586 = vld [vmem:[%s1574 + $0x14] sm:%s1567]
                %1587 = vst [vmem:[%s1575 + $0x14] sm:%s1567] %v1586
                %v1588 = vld [vmem:[%s1574 + $0x18] sm:%s1567]
                %1589 = vst [vmem:[%s1575 + $0x18] sm:%s1567] %v1588
                %v1590 = vld [vmem:[%s1574 + $0x1c] sm:%s1567]
                %1591 = vst [vmem:[%s1575 + $0x1c] sm:%s1567] %v1590
                %v1592 = vld [vmem:[%s1574 + $0x20] sm:%s1567]
                %1593 = vst [vmem:[%s1575 + $0x20] sm:%s1567] %v1592
                %v1594 = vld [vmem:[%s1574 + $0x24] sm:%s1567]
                %1595 = vst [vmem:[%s1575 + $0x24] sm:%s1567] %v1594
                %v1596 = vld [vmem:[%s1574 + $0x28] sm:%s1567]
                %1597 = vst [vmem:[%s1575 + $0x28] sm:%s1567] %v1596
                %v1598 = vld [vmem:[%s1574 + $0x2c] sm:%s1567]
                %1599 = vst [vmem:[%s1575 + $0x2c] sm:%s1567] %v1598
                %v1600 = vld [vmem:[%s1574 + $0x30] sm:%s1567]
                %1601 = vst [vmem:[%s1575 + $0x30] sm:%s1567] %v1600
                %v1602 = vld [vmem:[%s1574 + $0x34] sm:%s1567]
                %1603 = vst [vmem:[%s1575 + $0x34] sm:%s1567] %v1602
                %v1604 = vld [vmem:[%s1574 + $0x38] sm:%s1567]
                %1605 = vst [vmem:[%s1575 + $0x38] sm:%s1567] %v1604
                %v1606 = vld [vmem:[%s1574 + $0x3c] sm:%s1567]
                %1607 = vst [vmem:[%s1575 + $0x3c] sm:%s1567] %v1606
                %v1608 = vld [vmem:[%s1574 + $0x40] sm:%s1567]
                %1609 = vst [vmem:[%s1575 + $0x80] sm:%s1567] %v1608
                %v1610 = vld [vmem:[%s1574 + $0x44] sm:%s1567]
                %1611 = vst [vmem:[%s1575 + $0x84] sm:%s1567] %v1610
                %v1612 = vld [vmem:[%s1574 + $0x48] sm:%s1567]
                %1613 = vst [vmem:[%s1575 + $0x88] sm:%s1567] %v1612
                %v1614 = vld [vmem:[%s1574 + $0x4c] sm:%s1567]
                %1615 = vst [vmem:[%s1575 + $0x8c] sm:%s1567] %v1614
                %v1616 = vld [vmem:[%s1574 + $0x50] sm:%s1567]
                %1617 = vst [vmem:[%s1575 + $0x90] sm:%s1567] %v1616
                %v1618 = vld [vmem:[%s1574 + $0x54] sm:%s1567]
                %1619 = vst [vmem:[%s1575 + $0x94] sm:%s1567] %v1618
                %v1620 = vld [vmem:[%s1574 + $0x58] sm:%s1567]
                %1621 = vst [vmem:[%s1575 + $0x98] sm:%s1567] %v1620
                %v1622 = vld [vmem:[%s1574 + $0x5c] sm:%s1567]
                %1623 = vst [vmem:[%s1575 + $0x9c] sm:%s1567] %v1622
                %v1624 = vld [vmem:[%s1574 + $0x60] sm:%s1567]
                %1625 = vst [vmem:[%s1575 + $0xa0] sm:%s1567] %v1624
                %v1626 = vld [vmem:[%s1574 + $0x64] sm:%s1567]
                %1627 = vst [vmem:[%s1575 + $0xa4] sm:%s1567] %v1626
                %v1628 = vld [vmem:[%s1574 + $0x68] sm:%s1567]
                %1629 = vst [vmem:[%s1575 + $0xa8] sm:%s1567] %v1628
                %v1630 = vld [vmem:[%s1574 + $0x6c] sm:%s1567]
                %1631 = vst [vmem:[%s1575 + $0xac] sm:%s1567] %v1630
                %v1632 = vld [vmem:[%s1574 + $0x70] sm:%s1567]
                %1633 = vst [vmem:[%s1575 + $0xb0] sm:%s1567] %v1632
                %v1634 = vld [vmem:[%s1574 + $0x74] sm:%s1567]
                %1635 = vst [vmem:[%s1575 + $0xb4] sm:%s1567] %v1634
                %v1636 = vld [vmem:[%s1574 + $0x78] sm:%s1567]
                %1637 = vst [vmem:[%s1575 + $0xb8] sm:%s1567] %v1636
                %v1638 = vld [vmem:[%s1574 + $0x7c] sm:%s1567]
                %1639 = vst [vmem:[%s1575 + $0xbc] sm:%s1567] %v1638
                %v1640 = vld [vmem:[%s1574 + $0x80] sm:%s1567]
                %1641 = vst [vmem:[%s1575 + $0x100] sm:%s1567] %v1640
                %v1642 = vld [vmem:[%s1574 + $0x84] sm:%s1567]
                %1643 = vst [vmem:[%s1575 + $0x104] sm:%s1567] %v1642
                %v1644 = vld [vmem:[%s1574 + $0x88] sm:%s1567]
                %1645 = vst [vmem:[%s1575 + $0x108] sm:%s1567] %v1644
                %v1646 = vld [vmem:[%s1574 + $0x8c] sm:%s1567]
                %1647 = vst [vmem:[%s1575 + $0x10c] sm:%s1567] %v1646
                %v1648 = vld [vmem:[%s1574 + $0x90] sm:%s1567]
                %1649 = vst [vmem:[%s1575 + $0x110] sm:%s1567] %v1648
                %v1650 = vld [vmem:[%s1574 + $0x94] sm:%s1567]
                %1651 = vst [vmem:[%s1575 + $0x114] sm:%s1567] %v1650
                %v1652 = vld [vmem:[%s1574 + $0x98] sm:%s1567]
                %1653 = vst [vmem:[%s1575 + $0x118] sm:%s1567] %v1652
                %v1654 = vld [vmem:[%s1574 + $0x9c] sm:%s1567]
                %1655 = vst [vmem:[%s1575 + $0x11c] sm:%s1567] %v1654
                %v1656 = vld [vmem:[%s1574 + $0xa0] sm:%s1567]
                %1657 = vst [vmem:[%s1575 + $0x120] sm:%s1567] %v1656
                %v1658 = vld [vmem:[%s1574 + $0xa4] sm:%s1567]
                %1659 = vst [vmem:[%s1575 + $0x124] sm:%s1567] %v1658
                %v1660 = vld [vmem:[%s1574 + $0xa8] sm:%s1567]
                %1661 = vst [vmem:[%s1575 + $0x128] sm:%s1567] %v1660
                %v1662 = vld [vmem:[%s1574 + $0xac] sm:%s1567]
                %1663 = vst [vmem:[%s1575 + $0x12c] sm:%s1567] %v1662
                %v1664 = vld [vmem:[%s1574 + $0xb0] sm:%s1567]
                %1665 = vst [vmem:[%s1575 + $0x130] sm:%s1567] %v1664
                %v1666 = vld [vmem:[%s1574 + $0xb4] sm:%s1567]
                %1667 = vst [vmem:[%s1575 + $0x134] sm:%s1567] %v1666
                %v1668 = vld [vmem:[%s1574 + $0xb8] sm:%s1567]
                %1669 = vst [vmem:[%s1575 + $0x138] sm:%s1567] %v1668
                %v1670 = vld [vmem:[%s1574 + $0xbc] sm:%s1567]
                %1671 = vst [vmem:[%s1575 + $0x13c] sm:%s1567] %v1670
                %v1672 = vld [vmem:[%s1574 + $0xc0] sm:%s1567]
                %1673 = vst [vmem:[%s1575 + $0x180] sm:%s1567] %v1672
                %v1674 = vld [vmem:[%s1574 + $0xc4] sm:%s1567]
                %1675 = vst [vmem:[%s1575 + $0x184] sm:%s1567] %v1674
                %v1676 = vld [vmem:[%s1574 + $0xc8] sm:%s1567]
                %1677 = vst [vmem:[%s1575 + $0x188] sm:%s1567] %v1676
                %v1678 = vld [vmem:[%s1574 + $0xcc] sm:%s1567]
                %1679 = vst [vmem:[%s1575 + $0x18c] sm:%s1567] %v1678
                %v1680 = vld [vmem:[%s1574 + $0xd0] sm:%s1567]
                %1681 = vst [vmem:[%s1575 + $0x190] sm:%s1567] %v1680
                %v1682 = vld [vmem:[%s1574 + $0xd4] sm:%s1567]
                %1683 = vst [vmem:[%s1575 + $0x194] sm:%s1567] %v1682
                %v1684 = vld [vmem:[%s1574 + $0xd8] sm:%s1567]
                %1685 = vst [vmem:[%s1575 + $0x198] sm:%s1567] %v1684
                %v1686 = vld [vmem:[%s1574 + $0xdc] sm:%s1567]
                %1687 = vst [vmem:[%s1575 + $0x19c] sm:%s1567] %v1686
                %v1688 = vld [vmem:[%s1574 + $0xe0] sm:%s1567]
                %1689 = vst [vmem:[%s1575 + $0x1a0] sm:%s1567] %v1688
                %v1690 = vld [vmem:[%s1574 + $0xe4] sm:%s1567]
                %1691 = vst [vmem:[%s1575 + $0x1a4] sm:%s1567] %v1690
                %v1692 = vld [vmem:[%s1574 + $0xe8] sm:%s1567]
                %1693 = vst [vmem:[%s1575 + $0x1a8] sm:%s1567] %v1692
                %v1694 = vld [vmem:[%s1574 + $0xec] sm:%s1567]
                %1695 = vst [vmem:[%s1575 + $0x1ac] sm:%s1567] %v1694
                %v1696 = vld [vmem:[%s1574 + $0xf0] sm:%s1567]
                %1697 = vst [vmem:[%s1575 + $0x1b0] sm:%s1567] %v1696
                %v1698 = vld [vmem:[%s1574 + $0xf4] sm:%s1567]
                %1699 = vst [vmem:[%s1575 + $0x1b4] sm:%s1567] %v1698
                %v1700 = vld [vmem:[%s1574 + $0xf8] sm:%s1567]
                %1701 = vst [vmem:[%s1575 + $0x1b8] sm:%s1567] %v1700
                %v1702 = vld [vmem:[%s1574 + $0xfc] sm:%s1567]
                %1703 = vst [vmem:[%s1575 + $0x1bc] sm:%s1567] %v1702
              $region110: #{tpu_custom_call.1} parent=104 // loop_footer
                %s1573 = sadd.s32 1, %s1569
              $region111: #{tpu_custom_call.1} parent=104 // loop_footer_branch
                %1568 = sbr.rel target = $region107
              $region112: #{tpu_custom_call.1} parent=104 // loop_exit
                _
            $region105: #{tpu_custom_call.1} parent=96 // pred_fallthru
              _
          $region97: #{tpu_custom_call.1} parent=92 // pred_fallthru
            _
          %1852 = vnop
        $region93: #{tpu_custom_call.1} parent=31 // pred_fallthru
          _
      $region32: #{tpu_custom_call.1} parent=5 // pred_fallthru
        _
      %p1853 = scmp.le.s32.totalorder 2, %s19
      // Predicated region
      $region131: #{tpu_custom_call.1} parent=5 // pred_check
        %p1854 = pneg %p1853
      $region132: #{tpu_custom_call.1} parent=5 // pred_check_branch
        %1856 = sbr.rel (%p1854) target = $region134
      $region133: #{tpu_custom_call.1} parent=5 // pred_region
        %s1857 = ssub.s32 %s19, 2
        // Predicated region
        $region135: #{tpu_custom_call.1} parent=133 // pred_check
          %p1858 = pneg %p132
        $region136: #{tpu_custom_call.1} parent=133 // pred_check_branch
          %1860 = sbr.rel (%p1858) target = $region138
        $region137: #{tpu_custom_call.1} parent=133 // pred_region
          %s1861 = sand.u32 %s117, 1
          %s1862 = sand.u32 %s117, 1
          %s1863 = smul.addr %s1862, 256
          %s1864 = scalar_lea.vmem [#allocation8], %s1863
        $region138: #{tpu_custom_call.1} parent=133 // pred_fallthru
          _
        // Predicated region
        $region139: #{tpu_custom_call.1} parent=133 // pred_check
          %p1865 = pneg %p160
        $region140: #{tpu_custom_call.1} parent=133 // pred_check_branch
          %1867 = sbr.rel (%p1865) target = $region142
        $region141: #{tpu_custom_call.1} parent=133 // pred_region
          %s1868 = sand.u32 %s145, 1
          %s1869 = scalar_lea.sflag [#allocation4], %s1868
          %s1870 = sand.u32 %s145, 1
          %s1871 = smul.addr %s1870, 64
          %s1872 = scalar_lea.vmem [#allocation9], %s1871
          %1874 = dma.done %s1869, 1024
        $region142: #{tpu_custom_call.1} parent=133 // pred_fallthru
          _
        // Predicated region
        $region143: #{tpu_custom_call.1} parent=133 // pred_check
          %p1875 = pneg %p188
        $region144: #{tpu_custom_call.1} parent=133 // pred_check_branch
          %1877 = sbr.rel (%p1875) target = $region146
        $region145: #{tpu_custom_call.1} parent=133 // pred_region
          %s1878 = sand.u32 %s173, 1
          %s1879 = sand.u32 %s173, 1
          %s1880 = smul.addr %s1879, 256
          %s1881 = scalar_lea.vmem [#allocation10], %s1880
        $region146: #{tpu_custom_call.1} parent=133 // pred_fallthru
          _
      $region134: #{tpu_custom_call.1} parent=5 // pred_fallthru
        _
    $region6: #{tpu_custom_call.1} parent=1 // loop_footer
      %s23 = sadd.s32 1, %s19
    $region7: #{tpu_custom_call.1} parent=1 // loop_footer_branch
      %18 = sbr.rel target = $region3
    $region8: #{tpu_custom_call.1} parent=1 // loop_exit
      _
    %1882 = vsyncpa [#allocation3], 1
    %s1883 = scalar_lea.sflag [#allocation3], 1
    %1884 = vsyncpa %s1883, 1
    %1885 = vsyncpa [#allocation6], 1
    %1886 = vsyncpa [#allocation4], 1
    %s1887 = scalar_lea.sflag [#allocation4], 1
    %1888 = vsyncpa %s1887, 1

</llo_original>
